<compile_context>
chip_gen: v6e
topology: v6e:2x2x1
jax: 0.10.0
libtpu: 0.0.40
codegen_flags: <defaults>
</compile_context>

<pallas_src>
import math
import functools

import jax
import jax.numpy as jnp
from jax.experimental import pallas as pl
from jax.experimental.pallas import tpu as pltpu


def _mha_kernel(xq_ref, xk_ref, xv_ref, w_ref, b_ref, o_ref, *, h, d_k, scale):
    """One batch element per grid step.

    xq/xk/xv_ref: (1, S, D) f32 activations.
    w_ref:        (3, h, D, d_k) bf16 per-head projection weights [q, k, v].
    b_ref:        (3, h, 1, d_k) f32 per-head biases.
    o_ref:        (1, S, D) output.
    """
    S = xq_ref.shape[1]
    D = h * d_k

    def project(x_ref, idx):
        # Head-batched projection: broadcast the (S, D) activation over heads
        # and run ONE batched bf16 MXU matmul against the (h, D, d_k) weight
        # slab, accumulating in f32.  (At large S/h, tile heads via the grid
        # instead of broadcasting the activation.)
        xb = jnp.broadcast_to(x_ref[0].astype(jnp.bfloat16), (h, S, D))
        proj = jnp.einsum("hsd,hdk->hsk", xb, w_ref[idx],
                          preferred_element_type=jnp.float32)
        return proj + b_ref[idx]                                   # (h, S, d_k)

    # 1/sqrt(d_k) folded into q (h*S*d_k VPU mults instead of h*S*S).
    q = project(xq_ref, 0) * scale
    k = project(xk_ref, 1)
    v = project(xv_ref, 2)

    # Batched scores = q @ k^T over heads; f32 operands (small S) so the result
    # tracks the f32 torch module.  At production S, cast q/k (and p/v) to bf16.
    scores = jnp.einsum("hqd,hkd->hqk", q, k,
                        preferred_element_type=jnp.float32)        # (h, S, S)

    # Numerically-stable softmax with an EXACT divide (review: approx
    # reciprocal loosened parity with the f32 reference for no real gain here).
    scores = scores - jnp.max(scores, axis=-1, keepdims=True)
    e = jnp.exp(scores)
    p = e / jnp.sum(e, axis=-1, keepdims=True)
    # dropout(p_attn) -> identity (eval mode).

    o = jnp.einsum("hqk,hkd->hqd", p, v,
                   preferred_element_type=jnp.float32)             # (h, S, d_k)

    # Head merge == x.transpose(1,2).contiguous().view(B, S, h*d_k).
    # Static column stores into the resident output block; lane-dense whenever
    # d_k is a multiple of 128 (masked 8-lane stores only at this toy d_k=8).
    for hd in range(h):
        o_ref[0, :, hd * d_k:(hd + 1) * d_k] = o[hd].astype(o_ref.dtype)


def pack_mha_params(params, *, h):
    """One-time packing at parameter-load time (NOT per forward call).

    Returns:
      w_heads: (3, h, D, d_k) bf16 — per-head slices of Wq, Wk, Wv (x @ W + b
               convention, i.e. torch weights pre-transposed to [d_in, d_out]).
      b_heads: (3, h, 1, d_k) f32.
    """
    D = params["wq"].shape[0]
    assert D % h == 0
    d_k = D // h

    def w_per_head(w):                       # (D, D) -> (h, D, d_k)
        return w.reshape(D, h, d_k).transpose(1, 0, 2)

    def b_per_head(b):                       # (D,) -> (h, 1, d_k)
        return b.reshape(h, 1, d_k)

    w_heads = jnp.stack(
        [w_per_head(params["wq"]), w_per_head(params["wk"]),
         w_per_head(params["wv"])]).astype(jnp.bfloat16)
    b_heads = jnp.stack(
        [b_per_head(params["bq"]), b_per_head(params["bk"]),
         b_per_head(params["bv"])]).astype(jnp.float32)
    return w_heads, b_heads


def multi_headed_attention(query, key, value, w_heads, b_heads, *, h):
    """query/key/value: [B, S, D] f32.  w_heads/b_heads: from pack_mha_params."""
    B, S, D = query.shape
    assert D % h == 0
    d_k = D // h

    kernel = functools.partial(_mha_kernel, h=h, d_k=d_k,
                               scale=1.0 / math.sqrt(d_k))

    return pl.pallas_call(
        kernel,
        out_shape=jax.ShapeDtypeStruct((B, S, D), query.dtype),
        grid_spec=pltpu.PrefetchScalarGridSpec(
            num_scalar_prefetch=0,
            grid=(B,),
            in_specs=[
                # Three separate activation streams (no wrapper-side concat).
                pl.BlockSpec((1, S, D), lambda b: (b, 0, 0)),
                pl.BlockSpec((1, S, D), lambda b: (b, 0, 0)),
                pl.BlockSpec((1, S, D), lambda b: (b, 0, 0)),
                # Per-head weight/bias slabs, resident across the batch loop.
                pl.BlockSpec((3, h, D, d_k), lambda b: (0, 0, 0, 0)),
                pl.BlockSpec((3, h, 1, d_k), lambda b: (0, 0, 0, 0)),
            ],
            out_specs=pl.BlockSpec((1, S, D), lambda b: (b, 0, 0)),
        ),
        compiler_params=pltpu.CompilerParams(
            dimension_semantics=("parallel",),
            # Explicit scoped-VMEM budget; re-derive per generation (<= ~48 MiB
            # of tiles on v7x's 64 MiB, up to ~100 MiB on v5e/v6e's 128 MiB).
            vmem_limit_bytes=32 * 1024 * 1024,
        ),
    )(query, key, value, w_heads, b_heads)


def _reference_mha(query, key, value, params, *, h):
    """Plain-JAX f32 reference mirroring the PyTorch module (no mask, eval)."""
    B, S, D = query.shape
    d_k = D // h

    def lin(x, w, b):
        return x @ w + b

    def split_heads(x):
        return x.reshape(B, S, h, d_k).transpose(0, 2, 1, 3)   # (B, h, S, d_k)

    q = split_heads(lin(query, params["wq"], params["bq"]))
    k = split_heads(lin(key, params["wk"], params["bk"]))
    v = split_heads(lin(value, params["wv"], params["bv"]))

    scores = jnp.einsum("bhqd,bhkd->bhqk", q, k) / math.sqrt(d_k)
    p = jax.nn.softmax(scores, axis=-1)
    out = jnp.einsum("bhqk,bhkd->bhqd", p, v)
    return out.transpose(0, 2, 1, 3).reshape(B, S, D)


if __name__ == "__main__":
    # Small shapes consistent with the module: batch=2, seq=8, d_model=32, h=4.
    B, S, D, H = 2, 8, 32, 4

    key0 = jax.random.PRNGKey(0)
    keys = jax.random.split(key0, 10)

    query = jax.random.normal(keys[0], (B, S, D), dtype=jnp.float32)
    keyx = jax.random.normal(keys[1], (B, S, D), dtype=jnp.float32)
    value = jax.random.normal(keys[2], (B, S, D), dtype=jnp.float32)

    # Deterministic parameters (shapes of nn.Linear(d_model, d_model) x3,
    # stored pre-transposed as [d_in, d_out] so y = x @ W + b).
    scale = 1.0 / math.sqrt(D)
    params = {
        "wq": jax.random.uniform(keys[3], (D, D), jnp.float32, -scale, scale),
        "bq": jax.random.uniform(keys[4], (D,), jnp.float32, -scale, scale),
        "wk": jax.random.uniform(keys[5], (D, D), jnp.float32, -scale, scale),
        "bk": jax.random.uniform(keys[6], (D,), jnp.float32, -scale, scale),
        "wv": jax.random.uniform(keys[7], (D, D), jnp.float32, -scale, scale),
        "bv": jax.random.uniform(keys[8], (D,), jnp.float32, -scale, scale),
    }

    # One-time packing (hoisted out of the forward path).
    w_heads, b_heads = pack_mha_params(params, h=H)

    out = multi_headed_attention(query, keyx, value, w_heads, b_heads, h=H)
    out = jax.block_until_ready(out)

    ref = _reference_mha(query, keyx, value, params, h=H)
    assert out.shape == (B, S, D)
    # Only the projection matmuls run bf16 (f32 accumulation); the attention
    # core and softmax are exact f32, so the match vs the f32 reference is
    # tight (~1e-3); 2e-2 leaves margin.
    assert jnp.allclose(out, ref, atol=2e-2, rtol=2e-2), "mismatch vs reference"

    print("KERNEL_OK")
</pallas_src>

<mosaic_0001>
module attributes {stable_mosaic.version = 11 : i64} {
  func.func @_mha_kernel(%arg0: i32, %arg1: memref<1x8x32xf32, #tpu.memory_space<vmem>>, %arg2: memref<1x8x32xf32, #tpu.memory_space<vmem>>, %arg3: memref<1x8x32xf32, #tpu.memory_space<vmem>>, %arg4: memref<3x4x32x8xbf16, #tpu.memory_space<vmem>>, %arg5: memref<3x4x1x8xf32, #tpu.memory_space<vmem>>, %arg6: memref<1x8x32xf32, #tpu.memory_space<vmem>>) attributes {dimension_semantics = [#tpu.dimension_semantics<parallel>], iteration_bounds = array<i64: 2>, scalar_prefetch = 0 : i64, scratch_operands = 0 : i64, tpu.core_type = #tpu.core_type<tc>, window_params = [{transform_indices = @transform_0, window_bounds = array<i64: 1, 8, 32>}, {transform_indices = @transform_1, window_bounds = array<i64: 1, 8, 32>}, {transform_indices = @transform_2, window_bounds = array<i64: 1, 8, 32>}, {pipeline_mode = #tpu.pipeline_mode<synchronous>, transform_indices = @transform_3, window_bounds = array<i64: 3, 4, 32, 8>}, {pipeline_mode = #tpu.pipeline_mode<synchronous>, transform_indices = @transform_4, window_bounds = array<i64: 3, 4, 1, 8>}, {transform_indices = @transform_5, window_bounds = array<i64: 1, 8, 32>}]} {
    %c0 = arith.constant 0 : index
    %c0_0 = arith.constant 0 : index
    %c0_1 = arith.constant 0 : index
    %0 = vector.load %arg1[%c0, %c0_0, %c0_1] : memref<1x8x32xf32, #tpu.memory_space<vmem>>, vector<1x8x32xf32>
    %1 = vector.shape_cast %0 : vector<1x8x32xf32> to vector<8x32xf32>
    %2 = arith.truncf %1 : vector<8x32xf32> to vector<8x32xbf16>
    %3 = vector.shape_cast %2 : vector<8x32xbf16> to vector<1x8x32xbf16>
    %4 = vector.broadcast %3 : vector<1x8x32xbf16> to vector<4x8x32xbf16>
    %c0_2 = arith.constant 0 : index
    %c0_3 = arith.constant 0 : index
    %c0_4 = arith.constant 0 : index
    %c0_5 = arith.constant 0 : index
    %5 = vector.load %arg4[%c0_2, %c0_3, %c0_4, %c0_5] : memref<3x4x32x8xbf16, #tpu.memory_space<vmem>>, vector<1x4x32x8xbf16>
    %6 = vector.shape_cast %5 : vector<1x4x32x8xbf16> to vector<4x32x8xbf16>
    "tpu.trace_start"() <{level = 10 : i32, message = "hsd,hdk->hsk"}> : () -> ()
    %cst = arith.constant dense<0.000000e+00> : vector<4x8x8xf32>
    %7 = tpu.matmul %4, %6, %cst {dimension_numbers = #tpu.dot_dimension_numbers<[2], [1], [1], [2], [0, 0, 0, 1, 1, 2], [0], [0]>} : vector<4x8x32xbf16>, vector<4x32x8xbf16>, vector<4x8x8xf32> -> vector<4x8x8xf32>
    "tpu.trace_stop"() : () -> ()
    %c0_6 = arith.constant 0 : index
    %c0_7 = arith.constant 0 : index
    %c0_8 = arith.constant 0 : index
    %c0_9 = arith.constant 0 : index
    %8 = vector.load %arg5[%c0_6, %c0_7, %c0_8, %c0_9] : memref<3x4x1x8xf32, #tpu.memory_space<vmem>>, vector<1x4x1x8xf32>
    %9 = vector.shape_cast %8 : vector<1x4x1x8xf32> to vector<4x1x8xf32>
    %10 = vector.broadcast %9 : vector<4x1x8xf32> to vector<4x8x8xf32>
    %11 = arith.addf %7, %10 : vector<4x8x8xf32>
    %cst_10 = arith.constant 0.353553385 : f32
    %12 = vector.broadcast %cst_10 : f32 to vector<4x8x8xf32>
    %13 = arith.mulf %11, %12 : vector<4x8x8xf32>
    %c0_11 = arith.constant 0 : index
    %c0_12 = arith.constant 0 : index
    %c0_13 = arith.constant 0 : index
    %14 = vector.load %arg2[%c0_11, %c0_12, %c0_13] : memref<1x8x32xf32, #tpu.memory_space<vmem>>, vector<1x8x32xf32>
    %15 = vector.shape_cast %14 : vector<1x8x32xf32> to vector<8x32xf32>
    %16 = arith.truncf %15 : vector<8x32xf32> to vector<8x32xbf16>
    %17 = vector.shape_cast %16 : vector<8x32xbf16> to vector<1x8x32xbf16>
    %18 = vector.broadcast %17 : vector<1x8x32xbf16> to vector<4x8x32xbf16>
    %c1 = arith.constant 1 : index
    %c0_14 = arith.constant 0 : index
    %c0_15 = arith.constant 0 : index
    %c0_16 = arith.constant 0 : index
    %19 = vector.load %arg4[%c1, %c0_14, %c0_15, %c0_16] : memref<3x4x32x8xbf16, #tpu.memory_space<vmem>>, vector<1x4x32x8xbf16>
    %20 = vector.shape_cast %19 : vector<1x4x32x8xbf16> to vector<4x32x8xbf16>
    "tpu.trace_start"() <{level = 10 : i32, message = "hsd,hdk->hsk"}> : () -> ()
    %cst_17 = arith.constant dense<0.000000e+00> : vector<4x8x8xf32>
    %21 = tpu.matmul %18, %20, %cst_17 {dimension_numbers = #tpu.dot_dimension_numbers<[2], [1], [1], [2], [0, 0, 0, 1, 1, 2], [0], [0]>} : vector<4x8x32xbf16>, vector<4x32x8xbf16>, vector<4x8x8xf32> -> vector<4x8x8xf32>
    "tpu.trace_stop"() : () -> ()
    %c1_18 = arith.constant 1 : index
    %c0_19 = arith.constant 0 : index
    %c0_20 = arith.constant 0 : index
    %c0_21 = arith.constant 0 : index
    %22 = vector.load %arg5[%c1_18, %c0_19, %c0_20, %c0_21] : memref<3x4x1x8xf32, #tpu.memory_space<vmem>>, vector<1x4x1x8xf32>
    %23 = vector.shape_cast %22 : vector<1x4x1x8xf32> to vector<4x1x8xf32>
    %24 = vector.broadcast %23 : vector<4x1x8xf32> to vector<4x8x8xf32>
    %25 = arith.addf %21, %24 : vector<4x8x8xf32>
    %c0_22 = arith.constant 0 : index
    %c0_23 = arith.constant 0 : index
    %c0_24 = arith.constant 0 : index
    %26 = vector.load %arg3[%c0_22, %c0_23, %c0_24] : memref<1x8x32xf32, #tpu.memory_space<vmem>>, vector<1x8x32xf32>
    %27 = vector.shape_cast %26 : vector<1x8x32xf32> to vector<8x32xf32>
    %28 = arith.truncf %27 : vector<8x32xf32> to vector<8x32xbf16>
    %29 = vector.shape_cast %28 : vector<8x32xbf16> to vector<1x8x32xbf16>
    %30 = vector.broadcast %29 : vector<1x8x32xbf16> to vector<4x8x32xbf16>
    %c2 = arith.constant 2 : index
    %c0_25 = arith.constant 0 : index
    %c0_26 = arith.constant 0 : index
    %c0_27 = arith.constant 0 : index
    %31 = vector.load %arg4[%c2, %c0_25, %c0_26, %c0_27] : memref<3x4x32x8xbf16, #tpu.memory_space<vmem>>, vector<1x4x32x8xbf16>
    %32 = vector.shape_cast %31 : vector<1x4x32x8xbf16> to vector<4x32x8xbf16>
    "tpu.trace_start"() <{level = 10 : i32, message = "hsd,hdk->hsk"}> : () -> ()
    %cst_28 = arith.constant dense<0.000000e+00> : vector<4x8x8xf32>
    %33 = tpu.matmul %30, %32, %cst_28 {dimension_numbers = #tpu.dot_dimension_numbers<[2], [1], [1], [2], [0, 0, 0, 1, 1, 2], [0], [0]>} : vector<4x8x32xbf16>, vector<4x32x8xbf16>, vector<4x8x8xf32> -> vector<4x8x8xf32>
    "tpu.trace_stop"() : () -> ()
    %c2_29 = arith.constant 2 : index
    %c0_30 = arith.constant 0 : index
    %c0_31 = arith.constant 0 : index
    %c0_32 = arith.constant 0 : index
    %34 = vector.load %arg5[%c2_29, %c0_30, %c0_31, %c0_32] : memref<3x4x1x8xf32, #tpu.memory_space<vmem>>, vector<1x4x1x8xf32>
    %35 = vector.shape_cast %34 : vector<1x4x1x8xf32> to vector<4x1x8xf32>
    %36 = vector.broadcast %35 : vector<4x1x8xf32> to vector<4x8x8xf32>
    %37 = arith.addf %33, %36 : vector<4x8x8xf32>
    "tpu.trace_start"() <{level = 10 : i32, message = "hqd,hkd->hqk"}> : () -> ()
    %cst_33 = arith.constant dense<0.000000e+00> : vector<4x8x8xf32>
    %38 = tpu.matmul %13, %25, %cst_33 {dimension_numbers = #tpu.dot_dimension_numbers<[2], [2], [1], [1], [0, 0, 0, 1, 1, 1], [0], [0]>} : vector<4x8x8xf32>, vector<4x8x8xf32>, vector<4x8x8xf32> -> vector<4x8x8xf32>
    "tpu.trace_stop"() : () -> ()
    %cst_34 = arith.constant dense<0xFF800000> : vector<4x8xf32>
    %39 = vector.multi_reduction <maximumf>, %38, %cst_34 [2] : vector<4x8x8xf32> to vector<4x8xf32>
    %40 = vector.shape_cast %39 : vector<4x8xf32> to vector<4x8x1xf32>
    %41 = vector.broadcast %40 : vector<4x8x1xf32> to vector<4x8x8xf32>
    %42 = arith.subf %38, %41 : vector<4x8x8xf32>
    %43 = math.exp %42 : vector<4x8x8xf32>
    %cst_35 = arith.constant dense<0.000000e+00> : vector<4x8xf32>
    %44 = vector.multi_reduction <add>, %43, %cst_35 [2] : vector<4x8x8xf32> to vector<4x8xf32>
    %45 = vector.shape_cast %44 : vector<4x8xf32> to vector<4x8x1xf32>
    %46 = vector.broadcast %45 : vector<4x8x1xf32> to vector<4x8x8xf32>
    %47 = arith.divf %43, %46 : vector<4x8x8xf32>
    "tpu.trace_start"() <{level = 10 : i32, message = "hqk,hkd->hqd"}> : () -> ()
    %cst_36 = arith.constant dense<0.000000e+00> : vector<4x8x8xf32>
    %48 = tpu.matmul %47, %37, %cst_36 {dimension_numbers = #tpu.dot_dimension_numbers<[2], [1], [1], [2], [0, 0, 0, 1, 1, 2], [0], [0]>} : vector<4x8x8xf32>, vector<4x8x8xf32>, vector<4x8x8xf32> -> vector<4x8x8xf32>
    "tpu.trace_stop"() : () -> ()
    %49 = vector.extract_strided_slice %48 {offsets = [0, 0, 0], sizes = [1, 8, 8], strides = [1, 1, 1]} : vector<4x8x8xf32> to vector<1x8x8xf32>
    %50 = vector.shape_cast %49 : vector<1x8x8xf32> to vector<8x8xf32>
    %c0_37 = arith.constant 0 : index
    %c0_38 = arith.constant 0 : index
    %c0_39 = arith.constant 0 : index
    %51 = vector.load %arg6[%c0_37, %c0_38, %c0_39] : memref<1x8x32xf32, #tpu.memory_space<vmem>>, vector<1x8x8xf32>
    %52 = vector.shape_cast %51 : vector<1x8x8xf32> to vector<8x8xf32>
    %53 = vector.shape_cast %50 : vector<8x8xf32> to vector<1x8x8xf32>
    tpu.vector_store %arg6[%c0_37, %c0_38, %c0_39], %53 {strides = array<i32>} : memref<1x8x32xf32, #tpu.memory_space<vmem>>, vector<1x8x8xf32>,
    %54 = vector.extract_strided_slice %48 {offsets = [1, 0, 0], sizes = [1, 8, 8], strides = [1, 1, 1]} : vector<4x8x8xf32> to vector<1x8x8xf32>
    %55 = vector.shape_cast %54 : vector<1x8x8xf32> to vector<8x8xf32>
    %c0_40 = arith.constant 0 : index
    %c0_41 = arith.constant 0 : index
    %c8 = arith.constant 8 : index
    %56 = vector.load %arg6[%c0_40, %c0_41, %c8] : memref<1x8x32xf32, #tpu.memory_space<vmem>>, vector<1x8x8xf32>
    %57 = vector.shape_cast %56 : vector<1x8x8xf32> to vector<8x8xf32>
    %58 = vector.shape_cast %55 : vector<8x8xf32> to vector<1x8x8xf32>
    tpu.vector_store %arg6[%c0_40, %c0_41, %c8], %58 {strides = array<i32>} : memref<1x8x32xf32, #tpu.memory_space<vmem>>, vector<1x8x8xf32>,
    %59 = vector.extract_strided_slice %48 {offsets = [2, 0, 0], sizes = [1, 8, 8], strides = [1, 1, 1]} : vector<4x8x8xf32> to vector<1x8x8xf32>
    %60 = vector.shape_cast %59 : vector<1x8x8xf32> to vector<8x8xf32>
    %c0_42 = arith.constant 0 : index
    %c0_43 = arith.constant 0 : index
    %c16 = arith.constant 16 : index
    %61 = vector.load %arg6[%c0_42, %c0_43, %c16] : memref<1x8x32xf32, #tpu.memory_space<vmem>>, vector<1x8x8xf32>
    %62 = vector.shape_cast %61 : vector<1x8x8xf32> to vector<8x8xf32>
    %63 = vector.shape_cast %60 : vector<8x8xf32> to vector<1x8x8xf32>
    tpu.vector_store %arg6[%c0_42, %c0_43, %c16], %63 {strides = array<i32>} : memref<1x8x32xf32, #tpu.memory_space<vmem>>, vector<1x8x8xf32>,
    %64 = vector.extract_strided_slice %48 {offsets = [3, 0, 0], sizes = [1, 8, 8], strides = [1, 1, 1]} : vector<4x8x8xf32> to vector<1x8x8xf32>
    %65 = vector.shape_cast %64 : vector<1x8x8xf32> to vector<8x8xf32>
    %c0_44 = arith.constant 0 : index
    %c0_45 = arith.constant 0 : index
    %c24 = arith.constant 24 : index
    %66 = vector.load %arg6[%c0_44, %c0_45, %c24] : memref<1x8x32xf32, #tpu.memory_space<vmem>>, vector<1x8x8xf32>
    %67 = vector.shape_cast %66 : vector<1x8x8xf32> to vector<8x8xf32>
    %68 = vector.shape_cast %65 : vector<8x8xf32> to vector<1x8x8xf32>
    tpu.vector_store %arg6[%c0_44, %c0_45, %c24], %68 {strides = array<i32>} : memref<1x8x32xf32, #tpu.memory_space<vmem>>, vector<1x8x8xf32>,
    return
  }
  func.func @transform_0(%arg0: i32) -> (i32, i32, i32) {
    %c0_i32 = arith.constant 0 : i32
    %c0_i32_0 = arith.constant 0 : i32
    %c0_i32_1 = arith.constant 0 : i32
    return %arg0, %c0_i32, %c0_i32_0 : i32, i32, i32
  }
  func.func @transform_1(%arg0: i32) -> (i32, i32, i32) {
    %c0_i32 = arith.constant 0 : i32
    %c0_i32_0 = arith.constant 0 : i32
    %c0_i32_1 = arith.constant 0 : i32
    return %arg0, %c0_i32, %c0_i32_0 : i32, i32, i32
  }
  func.func @transform_2(%arg0: i32) -> (i32, i32, i32) {
    %c0_i32 = arith.constant 0 : i32
    %c0_i32_0 = arith.constant 0 : i32
    %c0_i32_1 = arith.constant 0 : i32
    return %arg0, %c0_i32, %c0_i32_0 : i32, i32, i32
  }
  func.func @transform_3(%arg0: i32) -> (i32, i32, i32, i32) {
    %c0_i32 = arith.constant 0 : i32
    %c0_i32_0 = arith.constant 0 : i32
    %c0_i32_1 = arith.constant 0 : i32
    %c0_i32_2 = arith.constant 0 : i32
    %c0_i32_3 = arith.constant 0 : i32
    return %c0_i32, %c0_i32_0, %c0_i32_1, %c0_i32_2 : i32, i32, i32, i32
  }
  func.func @transform_4(%arg0: i32) -> (i32, i32, i32, i32) {
    %c0_i32 = arith.constant 0 : i32
    %c0_i32_0 = arith.constant 0 : i32
    %c0_i32_1 = arith.constant 0 : i32
    %c0_i32_2 = arith.constant 0 : i32
    %c0_i32_3 = arith.constant 0 : i32
    return %c0_i32, %c0_i32_0, %c0_i32_1, %c0_i32_2 : i32, i32, i32, i32
  }
  func.func @transform_5(%arg0: i32) -> (i32, i32, i32) {
    %c0_i32 = arith.constant 0 : i32
    %c0_i32_0 = arith.constant 0 : i32
    %c0_i32_1 = arith.constant 0 : i32
    return %arg0, %c0_i32, %c0_i32_0 : i32, i32, i32
  }
}

</mosaic_0001>

<llo_original>
// kernel: tpu_custom_call.1
$region0: #{tpu_custom_call.1}
  #allocation0 [shape = 'u32[]', space=smem, size = 0x4, offset = 0x4, fixed_abs, tag = 'smem constant byte address 0x4 - core index']
  #allocation1 [shape = 'u32[144,128]{1,0:T(1,128)}', space=vmem, size = 0x12000, scoped, tag = 'internal scratch']
  %s0 = inlined_call_operand.vmem [shape: f32[2,8,32], index: 0, kind: input, shape index: {}]
  %s1 = inlined_call_operand.vmem [shape: f32[2,8,32], index: 1, kind: input, shape index: {}]
  %s2 = inlined_call_operand.vmem [shape: f32[2,8,32], index: 2, kind: input, shape index: {}]
  %s3 = inlined_call_operand.vmem [shape: bf16[3,4,32,8], index: 3, kind: input, shape index: {}]
  %s4 = inlined_call_operand.vmem [shape: f32[3,4,1,8], index: 4, kind: input, shape index: {}]
  %s5 = inlined_call_operand.hbm [shape: f32[2,8,32], index: 5, kind: output, shape index: {}]
  %s6 = sld [smem:[#allocation0]]
  $region53: #{tpu_custom_call.1} parent=0
    _
  %s8 = ssub.s32 1, %s6
  %s9 = scalar_select 0, %s8, %s6
  $region1: #{tpu_custom_call.1} parent=0
    #allocation2 [shape = 'u8[8192]{0}', space=vmem, size = 0x2000, scoped, tag = 'output window, operand 0']
    #allocation3 [shape = 's32[2]{0}', space=sflag, size = 0x8, scoped, tag = 'scoped memory for tpu_custom_call.1']
    %10 = vsyncpa [#allocation3], 0
    %s11 = scalar_lea.sflag [#allocation3], 1
    %12 = vsyncpa %s11, 0
    loop: start=0, step=1, limit=4
    $region2: #{tpu_custom_call.1} parent=1 // loop_pre_header
      _
    $region3: #{tpu_custom_call.1} parent=1 // loop_header
      %s14 = sphi 0, %s18
      %p15 = scmp.ge.s32.totalorder %s14, 4
      %s24 = sphi 0, %s26
      %s27 = sphi 0, %s24
      %s28 = sphi 0, %s27
      %s44 = sphi 0, %s28
      %s50 = sphi 0, %s52
      %s53 = sphi 0, %s50
      %s54 = sphi 0, %s53
      %s70 = sphi 0, %s54
      %s76 = sphi 0, %s78
      %s79 = sphi 0, %s76
      %s80 = sphi 0, %s79
      %s96 = sphi 0, %s80
      %s100 = sphi 0, %s100
      %s102 = sphi 0, %s100
      %s103 = sphi 0, %s102
      %s117 = sphi 0, %s103
      %s121 = sphi 0, %s121
      %s123 = sphi 0, %s121
      %s124 = sphi 0, %s123
      %s138 = sphi 0, %s124
      %s144 = sphi 0, %s146
      %s147 = sphi 0, %s144
      %s148 = sphi 0, %s147
      %s164 = sphi 0, %s148
    $region4: #{tpu_custom_call.1} parent=1 // loop_header_branch
      %17 = sbr.rel (%p15) target = $region8
    $region5: #{tpu_custom_call.1} parent=1 // loop_body
      %s19 = ssub.s32 %s14, 1
      %s20 = ssub.s32 %s14, 2
      %s21 = sadd.s32 %s14, 1
      %s22 = ssub.s32 %s14, %s21
      %p23 = scmp.eq.s32.totalorder %s22, 0
      %s25 = sadd.s32 %s24, 1
      %s26 = scalar_select %p23, %s24, %s25
      %p29 = pneg %p23
      %p30 = scmp.eq.s32.totalorder %s14, 1
      %p31 = por %p29, %p30
      %p32 = scmp.ne.s32.totalorder %s24, %s27
      %p33 = scmp.eq.s32.totalorder %s14, 0
      %p34 = por %p32, %p33
      %p35 = scmp.ne.s32.totalorder %s24, %s27
      %p36 = scmp.eq.s32.totalorder %s19, 1
      %p37 = por %p35, %p36
      %p38 = scmp.ne.s32.totalorder %s27, %s28
      %p39 = scmp.eq.s32.totalorder %s19, 0
      %p40 = por %p38, %p39
      %p41 = scmp.ne.s32.totalorder %s27, %s28
      %p42 = scmp.eq.s32.totalorder %s20, 1
      %p43 = por %p41, %p42
      %p45 = scmp.ne.s32.totalorder %s28, %s44
      %p46 = scmp.eq.s32.totalorder %s20, 0
      %p47 = por %p45, %p46
      %s48 = ssub.s32 %s14, %s21
      %p49 = scmp.eq.s32.totalorder %s48, 0
      %s51 = sadd.s32 %s50, 1
      %s52 = scalar_select %p49, %s50, %s51
      %p55 = pneg %p49
      %p56 = scmp.eq.s32.totalorder %s14, 1
      %p57 = por %p55, %p56
      %p58 = scmp.ne.s32.totalorder %s50, %s53
      %p59 = scmp.eq.s32.totalorder %s14, 0
      %p60 = por %p58, %p59
      %p61 = scmp.ne.s32.totalorder %s50, %s53
      %p62 = scmp.eq.s32.totalorder %s19, 1
      %p63 = por %p61, %p62
      %p64 = scmp.ne.s32.totalorder %s53, %s54
      %p65 = scmp.eq.s32.totalorder %s19, 0
      %p66 = por %p64, %p65
      %p67 = scmp.ne.s32.totalorder %s53, %s54
      %p68 = scmp.eq.s32.totalorder %s20, 1
      %p69 = por %p67, %p68
      %p71 = scmp.ne.s32.totalorder %s54, %s70
      %p72 = scmp.eq.s32.totalorder %s20, 0
      %p73 = por %p71, %p72
      %s74 = ssub.s32 %s14, %s21
      %p75 = scmp.eq.s32.totalorder %s74, 0
      %s77 = sadd.s32 %s76, 1
      %s78 = scalar_select %p75, %s76, %s77
      %p81 = pneg %p75
      %p82 = scmp.eq.s32.totalorder %s14, 1
      %p83 = por %p81, %p82
      %p84 = scmp.ne.s32.totalorder %s76, %s79
      %p85 = scmp.eq.s32.totalorder %s14, 0
      %p86 = por %p84, %p85
      %p87 = scmp.ne.s32.totalorder %s76, %s79
      %p88 = scmp.eq.s32.totalorder %s19, 1
      %p89 = por %p87, %p88
      %p90 = scmp.ne.s32.totalorder %s79, %s80
      %p91 = scmp.eq.s32.totalorder %s19, 0
      %p92 = por %p90, %p91
      %p93 = scmp.ne.s32.totalorder %s79, %s80
      %p94 = scmp.eq.s32.totalorder %s20, 1
      %p95 = por %p93, %p94
      %p97 = scmp.ne.s32.totalorder %s80, %s96
      %p98 = scmp.eq.s32.totalorder %s20, 0
      %p99 = por %p97, %p98
      %s101 = sadd.s32 %s100, 1
      %p104 = scmp.eq.s32.totalorder %s14, 1
      %p105 = scmp.ne.s32.totalorder %s100, %s102
      %p106 = scmp.eq.s32.totalorder %s14, 0
      %p107 = por %p105, %p106
      %p108 = scmp.ne.s32.totalorder %s100, %s102
      %p109 = scmp.eq.s32.totalorder %s19, 1
      %p110 = por %p108, %p109
      %p111 = scmp.ne.s32.totalorder %s102, %s103
      %p112 = scmp.eq.s32.totalorder %s19, 0
      %p113 = por %p111, %p112
      %p114 = scmp.ne.s32.totalorder %s102, %s103
      %p115 = scmp.eq.s32.totalorder %s20, 1
      %p116 = por %p114, %p115
      %p118 = scmp.ne.s32.totalorder %s103, %s117
      %p119 = scmp.eq.s32.totalorder %s20, 0
      %p120 = por %p118, %p119
      %s122 = sadd.s32 %s121, 1
      %p125 = scmp.eq.s32.totalorder %s14, 1
      %p126 = scmp.ne.s32.totalorder %s121, %s123
      %p127 = scmp.eq.s32.totalorder %s14, 0
      %p128 = por %p126, %p127
      %p129 = scmp.ne.s32.totalorder %s121, %s123
      %p130 = scmp.eq.s32.totalorder %s19, 1
      %p131 = por %p129, %p130
      %p132 = scmp.ne.s32.totalorder %s123, %s124
      %p133 = scmp.eq.s32.totalorder %s19, 0
      %p134 = por %p132, %p133
      %p135 = scmp.ne.s32.totalorder %s123, %s124
      %p136 = scmp.eq.s32.totalorder %s20, 1
      %p137 = por %p135, %p136
      %p139 = scmp.ne.s32.totalorder %s124, %s138
      %p140 = scmp.eq.s32.totalorder %s20, 0
      %p141 = por %p139, %p140
      %s142 = ssub.s32 %s14, %s21
      %p143 = scmp.eq.s32.totalorder %s142, 0
      %s145 = sadd.s32 %s144, 1
      %s146 = scalar_select %p143, %s144, %s145
      %p149 = pneg %p143
      %p150 = scmp.eq.s32.totalorder %s14, 1
      %p151 = por %p149, %p150
      %p152 = scmp.ne.s32.totalorder %s144, %s147
      %p153 = scmp.eq.s32.totalorder %s14, 0
      %p154 = por %p152, %p153
      %p155 = scmp.ne.s32.totalorder %s144, %s147
      %p156 = scmp.eq.s32.totalorder %s19, 1
      %p157 = por %p155, %p156
      %p158 = scmp.ne.s32.totalorder %s147, %s148
      %p159 = scmp.eq.s32.totalorder %s19, 0
      %p160 = por %p158, %p159
      %p161 = scmp.ne.s32.totalorder %s147, %s148
      %p162 = scmp.eq.s32.totalorder %s20, 1
      %p163 = por %p161, %p162
      %p165 = scmp.ne.s32.totalorder %s148, %s164
      %p166 = scmp.eq.s32.totalorder %s20, 0
      %p167 = por %p165, %p166
      %p168 = scmp.le.s32.totalorder 1, %s14
      %p169 = scmp.lt.s32.totalorder %s14, 3
      %p170 = pnand %p168, %p169
      %p171 = pneg %p170
      // Predicated region
      $region9: #{tpu_custom_call.1} parent=5 // pred_check
        _
      $region10: #{tpu_custom_call.1} parent=5 // pred_check_branch
        %173 = sbr.rel (%p170) target = $region12
      $region11: #{tpu_custom_call.1} parent=5 // pred_region
        %s174 = ssub.s32 %s14, 1
        // Predicated region
        $region13: #{tpu_custom_call.1} parent=11 // pred_check
          %p175 = pneg %p113
        $region14: #{tpu_custom_call.1} parent=11 // pred_check_branch
          %177 = sbr.rel (%p175) target = $region16
        $region15: #{tpu_custom_call.1} parent=11 // pred_region
          _
        $region16: #{tpu_custom_call.1} parent=11 // pred_fallthru
          _
        // Predicated region
        $region17: #{tpu_custom_call.1} parent=11 // pred_check
          %p178 = pneg %p134
        $region18: #{tpu_custom_call.1} parent=11 // pred_check_branch
          %180 = sbr.rel (%p178) target = $region20
        $region19: #{tpu_custom_call.1} parent=11 // pred_region
          _
        $region20: #{tpu_custom_call.1} parent=11 // pred_fallthru
          _
      $region12: #{tpu_custom_call.1} parent=5 // pred_fallthru
        _
      %p181 = scmp.lt.s32.totalorder %s14, 2
      // Predicated region
      $region21: #{tpu_custom_call.1} parent=5 // pred_check
        %p182 = pneg %p181
      $region22: #{tpu_custom_call.1} parent=5 // pred_check_branch
        %184 = sbr.rel (%p182) target = $region24
      $region23: #{tpu_custom_call.1} parent=5 // pred_region
        // Predicated region
        $region25: #{tpu_custom_call.1} parent=23 // pred_check
          %p185 = pneg %p34
        $region26: #{tpu_custom_call.1} parent=23 // pred_check_branch
          %187 = sbr.rel (%p185) target = $region28
        $region27: #{tpu_custom_call.1} parent=23 // pred_region
          %p188 = scmp.lt.s32.totalorder %s14, 1
          %s189 = scalar_select %p188, %s14, 1
          %s190 = smul.addr %s189, 8
          %s191 = scalar_lea.vmem %s0, %s190
        $region28: #{tpu_custom_call.1} parent=23 // pred_fallthru
          _
        // Predicated region
        $region29: #{tpu_custom_call.1} parent=23 // pred_check
          %p192 = pneg %p60
        $region30: #{tpu_custom_call.1} parent=23 // pred_check_branch
          %194 = sbr.rel (%p192) target = $region32
        $region31: #{tpu_custom_call.1} parent=23 // pred_region
          %p195 = scmp.lt.s32.totalorder %s14, 1
          %s196 = scalar_select %p195, %s14, 1
          %s197 = smul.addr %s196, 8
          %s198 = scalar_lea.vmem %s1, %s197
        $region32: #{tpu_custom_call.1} parent=23 // pred_fallthru
          _
        // Predicated region
        $region33: #{tpu_custom_call.1} parent=23 // pred_check
          %p199 = pneg %p86
        $region34: #{tpu_custom_call.1} parent=23 // pred_check_branch
          %201 = sbr.rel (%p199) target = $region36
        $region35: #{tpu_custom_call.1} parent=23 // pred_region
          %p202 = scmp.lt.s32.totalorder %s14, 1
          %s203 = scalar_select %p202, %s14, 1
          %s204 = smul.addr %s203, 8
          %s205 = scalar_lea.vmem %s2, %s204
        $region36: #{tpu_custom_call.1} parent=23 // pred_fallthru
          _
      $region24: #{tpu_custom_call.1} parent=5 // pred_fallthru
        _
      %p206 = scmp.le.s32.totalorder 1, %s14
      %p207 = scmp.lt.s32.totalorder %s14, 3
      %p208 = pnand %p206, %p207
      %p209 = pneg %p208
      // Predicated region
      $region37: #{tpu_custom_call.1} parent=5 // pred_check
        _
      $region38: #{tpu_custom_call.1} parent=5 // pred_check_branch
        %211 = sbr.rel (%p208) target = $region40
      $region39: #{tpu_custom_call.1} parent=5 // pred_region
        %s212 = ssub.s32 %s14, 1
        %p213 = scmp.lt.s32.totalorder %s19, 1
        %s214 = scalar_select %p213, %s19, 1
        %s215 = smul.addr %s214, 8
        %s216 = scalar_lea.vmem %s0, %s215
        %p217 = pneg %p40
        %p218 = pneg %p37
        %p219 = scmp.lt.s32.totalorder %s19, 1
        %s220 = scalar_select %p219, %s19, 1
        %s221 = smul.addr %s220, 8
        %s222 = scalar_lea.vmem %s1, %s221
        %p223 = pneg %p66
        %p224 = pneg %p63
        %p225 = scmp.lt.s32.totalorder %s19, 1
        %s226 = scalar_select %p225, %s19, 1
        %s227 = smul.addr %s226, 8
        %s228 = scalar_lea.vmem %s2, %s227
        %p229 = pneg %p92
        %p230 = pneg %p89
        %p231 = pneg %p113
        %p232 = pneg %p110
        %p233 = pneg %p134
        %p234 = pneg %p131
        %p235 = pneg %p160
        %p236 = pneg %p157
        %s237 = sand.u32 %s147, 1
        %s238 = scalar_lea.sflag [#allocation3], %s237
        %s239 = sand.u32 %s147, 1
        %s240 = smul.addr %s239, 8
        %s241 = scalar_lea.vmem [#allocation2], %s240
        %p242 = scmp.lt.s32.totalorder %s19, 1
        %s243 = scalar_select %p242, %s19, 1
        %s244 = smul.addr %s243, 8
        %s245 = scalar_lea.vmem %s0, %s244
        %p246 = scmp.lt.s32.totalorder %s19, 1
        %s247 = scalar_select %p246, %s19, 1
        %s248 = smul.addr %s247, 8
        %s249 = scalar_lea.vmem %s1, %s248
        %p250 = scmp.lt.s32.totalorder %s19, 1
        %s251 = scalar_select %p250, %s19, 1
        %s252 = smul.addr %s251, 8
        %s253 = scalar_lea.vmem %s2, %s252
        %v255 = vld [vmem:[%s245] sm:$0xff]
        %v256 = vpack.c.bf16 %v255, %v255
        %v257 = vld [vmem:[%s3] sm:$0xf]
        %v258 = vld [vmem:[%s3 + $0x4] sm:$0xf]
        %v259 = vld [vmem:[%s3 + $0x8] sm:$0xf]
        %v260 = vld [vmem:[%s3 + $0xc] sm:$0xf]
        %v261 = vld [vmem:[%s3 + $0x10] sm:$0xf]
        %v262 = vld [vmem:[%s3 + $0x14] sm:$0xf]
        %v263 = vld [vmem:[%s3 + $0x18] sm:$0xf]
        %v264 = vld [vmem:[%s3 + $0x1c] sm:$0xf]
        %v265 = vld [vmem:[%s3 + $0x20] sm:$0xf]
        %v266 = vld [vmem:[%s3 + $0x24] sm:$0xf]
        %v267 = vld [vmem:[%s3 + $0x28] sm:$0xf]
        %v268 = vld [vmem:[%s3 + $0x2c] sm:$0xf]
        %v269 = vld [vmem:[%s3 + $0x30] sm:$0xf]
        %v270 = vld [vmem:[%s3 + $0x34] sm:$0xf]
        %v271 = vld [vmem:[%s3 + $0x38] sm:$0xf]
        %v272 = vld [vmem:[%s3 + $0x3c] sm:$0xf]
        %v273 = vld [vmem:[%s4] sm:$0x1]
        %v274 = vld [vmem:[%s4 + $0x1] sm:$0x1]
        %v275 = vld [vmem:[%s4 + $0x2] sm:$0x1]
        %v276 = vld [vmem:[%s4 + $0x3] sm:$0x1]
        %v281 = vlaneseq
        %v282 = vshrl.u32 %v281, 7
        %v283 = vsub.s32 0, %v282
        %v284 = vrot.slane %v273, %v283
        %v285 = vlaneseq
        %v286 = vshrl.u32 %v285, 7
        %v287 = vsub.s32 0, %v286
        %v288 = vrot.slane %v274, %v287
        %v289 = vlaneseq
        %v290 = vshrl.u32 %v289, 7
        %v291 = vsub.s32 0, %v290
        %v292 = vrot.slane %v275, %v291
        %v293 = vlaneseq
        %v294 = vshrl.u32 %v293, 7
        %v295 = vsub.s32 0, %v294
        %v296 = vrot.slane %v276, %v295
        %v305 = vunpack.c.l.b16 %v257
        %v306 = vunpack.c.l.b16 %v258
        %v307 = vunpack.c.l.b16 %v259
        %v308 = vunpack.c.l.b16 %v260
        %v309 = vpack.c.b16 %v306, %v305
        %v310 = vpack.c.b16 %v308, %v307
        %vm313 = vcmask 261120
        %v315 = vsel %vm313, %v256, 0
        %317 = vmatprep.subr.bf16.mxu0 0
        %318 = vmatpush1.bf16.msra.mxu0 0
        %319 = vmatprep.subr.bf16.mxu0 0
        %320 = vmatpush1.bf16.msra.mxu0 0
        %321 = vmatprep.subr.bf16.mxu0 0
        %322 = vmatpush1.bf16.msra.mxu0 0
        %323 = vmatprep.subr.bf16.mxu0 0
        %324 = vmatpush1.bf16.msra.mxu0 0
        %325 = vmatprep.subr.bf16.mxu0 0
        %326 = vmatpush1.bf16.msra.mxu0 0
        %327 = vmatprep.subr.bf16.mxu0 0
        %328 = vmatpush1.bf16.msra.mxu0 0
        %329 = vmatprep.subr.bf16.mxu0 0
        %330 = vmatpush1.bf16.msra.mxu0 %v310
        %331 = vmatprep.subr.bf16.mxu0 0
        %332 = vmatpush1.bf16.msra.mxu0 %v309
        %333 = vmatprep.subr.bf16.mxu0 0
        %334 = vmatpush2.bf16.msra.mxu0 0
        %335 = vmatprep.subr.bf16.mxu0 0
        %336 = vmatpush2.bf16.msra.mxu0 0
        %337 = vmatprep.subr.bf16.mxu0 0
        %338 = vmatpush2.bf16.msra.mxu0 0
        %339 = vmatprep.subr.bf16.mxu0 0
        %340 = vmatpush2.bf16.msra.mxu0 0
        %341 = vmatprep.subr.bf16.mxu0 0
        %342 = vmatpush2.bf16.msra.mxu0 0
        %343 = vmatprep.subr.bf16.mxu0 0
        %344 = vmatpush2.bf16.msra.mxu0 0
        %345 = vmatprep.subr.bf16.mxu0 0
        %346 = vmatpush2.bf16.msra.mxu0 0
        %347 = vmatprep.subr.bf16.mxu0 0
        %348 = vmatpush2.bf16.msra.mxu0 0
        %349 = vmatprep.mubr.bf16.mxu0 0
        %350 = vmatmul.mubr.bf16.gmra.mxu0 %v315
        %v351 = vpop.f32.mrf.mxu0
        %v352 = vadd.f32 %v284, %v351
        %v353 = vpop.f32.mrf.mxu0
        %v354 = vpop.f32.mrf.mxu0
        %v355 = vpop.f32.mrf.mxu0
        %356 = vdwg.mxu0
        %v361 = vunpack.c.l.b16 %v261
        %v362 = vunpack.c.l.b16 %v262
        %v363 = vunpack.c.l.b16 %v263
        %v364 = vunpack.c.l.b16 %v264
        %v365 = vpack.c.b16 %v362, %v361
        %v366 = vpack.c.b16 %v364, %v363
        %369 = vmatprep.subr.bf16.mxu0 0
        %370 = vmatpush1.bf16.msra.mxu0 0
        %371 = vmatprep.subr.bf16.mxu0 0
        %372 = vmatpush1.bf16.msra.mxu0 0
        %373 = vmatprep.subr.bf16.mxu0 0
        %374 = vmatpush1.bf16.msra.mxu0 0
        %375 = vmatprep.subr.bf16.mxu0 0
        %376 = vmatpush1.bf16.msra.mxu0 0
        %377 = vmatprep.subr.bf16.mxu0 0
        %378 = vmatpush1.bf16.msra.mxu0 0
        %379 = vmatprep.subr.bf16.mxu0 0
        %380 = vmatpush1.bf16.msra.mxu0 0
        %381 = vmatprep.subr.bf16.mxu0 0
        %382 = vmatpush1.bf16.msra.mxu0 %v366
        %383 = vmatprep.subr.bf16.mxu0 0
        %384 = vmatpush1.bf16.msra.mxu0 %v365
        %385 = vmatprep.subr.bf16.mxu0 0
        %386 = vmatpush2.bf16.msra.mxu0 0
        %387 = vmatprep.subr.bf16.mxu0 0
        %388 = vmatpush2.bf16.msra.mxu0 0
        %389 = vmatprep.subr.bf16.mxu0 0
        %390 = vmatpush2.bf16.msra.mxu0 0
        %391 = vmatprep.subr.bf16.mxu0 0
        %392 = vmatpush2.bf16.msra.mxu0 0
        %393 = vmatprep.subr.bf16.mxu0 0
        %394 = vmatpush2.bf16.msra.mxu0 0
        %395 = vmatprep.subr.bf16.mxu0 0
        %396 = vmatpush2.bf16.msra.mxu0 0
        %397 = vmatprep.subr.bf16.mxu0 0
        %398 = vmatpush2.bf16.msra.mxu0 0
        %399 = vmatprep.subr.bf16.mxu0 0
        %400 = vmatpush2.bf16.msra.mxu0 0
        %401 = vmatprep.mubr.bf16.mxu0 0
        %402 = vmatmul.mubr.bf16.gmra.mxu0 %v315
        %v403 = vpop.f32.mrf.mxu0
        %v404 = vadd.f32 %v288, %v403
        %v405 = vpop.f32.mrf.mxu0
        %v406 = vpop.f32.mrf.mxu0
        %v407 = vpop.f32.mrf.mxu0
        %408 = vdwg.mxu0
        %v413 = vunpack.c.l.b16 %v265
        %v414 = vunpack.c.l.b16 %v266
        %v415 = vunpack.c.l.b16 %v267
        %v416 = vunpack.c.l.b16 %v268
        %v417 = vpack.c.b16 %v414, %v413
        %v418 = vpack.c.b16 %v416, %v415
        %421 = vmatprep.subr.bf16.mxu0 0
        %422 = vmatpush1.bf16.msra.mxu0 0
        %423 = vmatprep.subr.bf16.mxu0 0
        %424 = vmatpush1.bf16.msra.mxu0 0
        %425 = vmatprep.subr.bf16.mxu0 0
        %426 = vmatpush1.bf16.msra.mxu0 0
        %427 = vmatprep.subr.bf16.mxu0 0
        %428 = vmatpush1.bf16.msra.mxu0 0
        %429 = vmatprep.subr.bf16.mxu0 0
        %430 = vmatpush1.bf16.msra.mxu0 0
        %431 = vmatprep.subr.bf16.mxu0 0
        %432 = vmatpush1.bf16.msra.mxu0 0
        %433 = vmatprep.subr.bf16.mxu0 0
        %434 = vmatpush1.bf16.msra.mxu0 %v418
        %435 = vmatprep.subr.bf16.mxu0 0
        %436 = vmatpush1.bf16.msra.mxu0 %v417
        %437 = vmatprep.subr.bf16.mxu0 0
        %438 = vmatpush2.bf16.msra.mxu0 0
        %439 = vmatprep.subr.bf16.mxu0 0
        %440 = vmatpush2.bf16.msra.mxu0 0
        %441 = vmatprep.subr.bf16.mxu0 0
        %442 = vmatpush2.bf16.msra.mxu0 0
        %443 = vmatprep.subr.bf16.mxu0 0
        %444 = vmatpush2.bf16.msra.mxu0 0
        %445 = vmatprep.subr.bf16.mxu0 0
        %446 = vmatpush2.bf16.msra.mxu0 0
        %447 = vmatprep.subr.bf16.mxu0 0
        %448 = vmatpush2.bf16.msra.mxu0 0
        %449 = vmatprep.subr.bf16.mxu0 0
        %450 = vmatpush2.bf16.msra.mxu0 0
        %451 = vmatprep.subr.bf16.mxu0 0
        %452 = vmatpush2.bf16.msra.mxu0 0
        %453 = vmatprep.mubr.bf16.mxu0 0
        %454 = vmatmul.mubr.bf16.gmra.mxu0 %v315
        %v455 = vpop.f32.mrf.mxu0
        %v456 = vadd.f32 %v292, %v455
        %v457 = vpop.f32.mrf.mxu0
        %v458 = vpop.f32.mrf.mxu0
        %v459 = vpop.f32.mrf.mxu0
        %460 = vdwg.mxu0
        %v465 = vunpack.c.l.b16 %v269
        %v466 = vunpack.c.l.b16 %v270
        %v467 = vunpack.c.l.b16 %v271
        %v468 = vunpack.c.l.b16 %v272
        %v469 = vpack.c.b16 %v466, %v465
        %v470 = vpack.c.b16 %v468, %v467
        %473 = vmatprep.subr.bf16.mxu0 0
        %474 = vmatpush1.bf16.msra.mxu0 0
        %475 = vmatprep.subr.bf16.mxu0 0
        %476 = vmatpush1.bf16.msra.mxu0 0
        %477 = vmatprep.subr.bf16.mxu0 0
        %478 = vmatpush1.bf16.msra.mxu0 0
        %479 = vmatprep.subr.bf16.mxu0 0
        %480 = vmatpush1.bf16.msra.mxu0 0
        %481 = vmatprep.subr.bf16.mxu0 0
        %482 = vmatpush1.bf16.msra.mxu0 0
        %483 = vmatprep.subr.bf16.mxu0 0
        %484 = vmatpush1.bf16.msra.mxu0 0
        %485 = vmatprep.subr.bf16.mxu0 0
        %486 = vmatpush1.bf16.msra.mxu0 %v470
        %487 = vmatprep.subr.bf16.mxu0 0
        %488 = vmatpush1.bf16.msra.mxu0 %v469
        %489 = vmatprep.subr.bf16.mxu0 0
        %490 = vmatpush2.bf16.msra.mxu0 0
        %491 = vmatprep.subr.bf16.mxu0 0
        %492 = vmatpush2.bf16.msra.mxu0 0
        %493 = vmatprep.subr.bf16.mxu0 0
        %494 = vmatpush2.bf16.msra.mxu0 0
        %495 = vmatprep.subr.bf16.mxu0 0
        %496 = vmatpush2.bf16.msra.mxu0 0
        %497 = vmatprep.subr.bf16.mxu0 0
        %498 = vmatpush2.bf16.msra.mxu0 0
        %499 = vmatprep.subr.bf16.mxu0 0
        %500 = vmatpush2.bf16.msra.mxu0 0
        %501 = vmatprep.subr.bf16.mxu0 0
        %502 = vmatpush2.bf16.msra.mxu0 0
        %503 = vmatprep.subr.bf16.mxu0 0
        %504 = vmatpush2.bf16.msra.mxu0 0
        %505 = vmatprep.mubr.bf16.mxu0 0
        %506 = vmatmul.mubr.bf16.gmra.mxu0 %v315
        %v507 = vpop.f32.mrf.mxu0
        %v508 = vadd.f32 %v296, %v507
        %v509 = vpop.f32.mrf.mxu0
        %v510 = vpop.f32.mrf.mxu0
        %v511 = vpop.f32.mrf.mxu0
        %512 = vdwg.mxu0
        %v513 = vmul.f32 %v352, 0.35355338
        %v514 = vmul.f32 %v404, 0.35355338
        %v515 = vmul.f32 %v456, 0.35355338
        %v516 = vmul.f32 %v508, 0.35355338
        %v517 = vld [vmem:[%s249] sm:$0xff]
        %v518 = vpack.c.bf16 %v517, %v517
        %s519 = scalar_lea.vmem %s3, 64
        %v520 = vld [vmem:[%s519] sm:$0xf]
        %v521 = vld [vmem:[%s519 + $0x4] sm:$0xf]
        %v522 = vld [vmem:[%s519 + $0x8] sm:$0xf]
        %v523 = vld [vmem:[%s519 + $0xc] sm:$0xf]
        %v524 = vld [vmem:[%s519 + $0x10] sm:$0xf]
        %v525 = vld [vmem:[%s519 + $0x14] sm:$0xf]
        %v526 = vld [vmem:[%s519 + $0x18] sm:$0xf]
        %v527 = vld [vmem:[%s519 + $0x1c] sm:$0xf]
        %v528 = vld [vmem:[%s519 + $0x20] sm:$0xf]
        %v529 = vld [vmem:[%s519 + $0x24] sm:$0xf]
        %v530 = vld [vmem:[%s519 + $0x28] sm:$0xf]
        %v531 = vld [vmem:[%s519 + $0x2c] sm:$0xf]
        %v532 = vld [vmem:[%s519 + $0x30] sm:$0xf]
        %v533 = vld [vmem:[%s519 + $0x34] sm:$0xf]
        %v534 = vld [vmem:[%s519 + $0x38] sm:$0xf]
        %v535 = vld [vmem:[%s519 + $0x3c] sm:$0xf]
        %s536 = scalar_lea.vmem %s4, 4
        %v537 = vld [vmem:[%s536] sm:$0x1]
        %v538 = vld [vmem:[%s536 + $0x1] sm:$0x1]
        %v539 = vld [vmem:[%s536 + $0x2] sm:$0x1]
        %v540 = vld [vmem:[%s536 + $0x3] sm:$0x1]
        %v545 = vlaneseq
        %v546 = vshrl.u32 %v545, 7
        %v547 = vsub.s32 0, %v546
        %v548 = vrot.slane %v537, %v547
        %v549 = vlaneseq
        %v550 = vshrl.u32 %v549, 7
        %v551 = vsub.s32 0, %v550
        %v552 = vrot.slane %v538, %v551
        %v553 = vlaneseq
        %v554 = vshrl.u32 %v553, 7
        %v555 = vsub.s32 0, %v554
        %v556 = vrot.slane %v539, %v555
        %v557 = vlaneseq
        %v558 = vshrl.u32 %v557, 7
        %v559 = vsub.s32 0, %v558
        %v560 = vrot.slane %v540, %v559
        %v569 = vunpack.c.l.b16 %v520
        %v570 = vunpack.c.l.b16 %v521
        %v571 = vunpack.c.l.b16 %v522
        %v572 = vunpack.c.l.b16 %v523
        %v573 = vpack.c.b16 %v570, %v569
        %v574 = vpack.c.b16 %v572, %v571
        %v578 = vsel %vm313, %v518, 0
        %580 = vmatprep.subr.bf16.mxu0 0
        %581 = vmatpush1.bf16.msra.mxu0 0
        %582 = vmatprep.subr.bf16.mxu0 0
        %583 = vmatpush1.bf16.msra.mxu0 0
        %584 = vmatprep.subr.bf16.mxu0 0
        %585 = vmatpush1.bf16.msra.mxu0 0
        %586 = vmatprep.subr.bf16.mxu0 0
        %587 = vmatpush1.bf16.msra.mxu0 0
        %588 = vmatprep.subr.bf16.mxu0 0
        %589 = vmatpush1.bf16.msra.mxu0 0
        %590 = vmatprep.subr.bf16.mxu0 0
        %591 = vmatpush1.bf16.msra.mxu0 0
        %592 = vmatprep.subr.bf16.mxu0 0
        %593 = vmatpush1.bf16.msra.mxu0 %v574
        %594 = vmatprep.subr.bf16.mxu0 0
        %595 = vmatpush1.bf16.msra.mxu0 %v573
        %596 = vmatprep.subr.bf16.mxu0 0
        %597 = vmatpush2.bf16.msra.mxu0 0
        %598 = vmatprep.subr.bf16.mxu0 0
        %599 = vmatpush2.bf16.msra.mxu0 0
        %600 = vmatprep.subr.bf16.mxu0 0
        %601 = vmatpush2.bf16.msra.mxu0 0
        %602 = vmatprep.subr.bf16.mxu0 0
        %603 = vmatpush2.bf16.msra.mxu0 0
        %604 = vmatprep.subr.bf16.mxu0 0
        %605 = vmatpush2.bf16.msra.mxu0 0
        %606 = vmatprep.subr.bf16.mxu0 0
        %607 = vmatpush2.bf16.msra.mxu0 0
        %608 = vmatprep.subr.bf16.mxu0 0
        %609 = vmatpush2.bf16.msra.mxu0 0
        %610 = vmatprep.subr.bf16.mxu0 0
        %611 = vmatpush2.bf16.msra.mxu0 0
        %612 = vmatprep.mubr.bf16.mxu0 0
        %613 = vmatmul.mubr.bf16.gmra.mxu0 %v578
        %v614 = vpop.f32.mrf.mxu0
        %v615 = vadd.f32 %v548, %v614
        %v616 = vpop.f32.mrf.mxu0
        %v617 = vpop.f32.mrf.mxu0
        %v618 = vpop.f32.mrf.mxu0
        %619 = vdwg.mxu0
        %v624 = vunpack.c.l.b16 %v524
        %v625 = vunpack.c.l.b16 %v525
        %v626 = vunpack.c.l.b16 %v526
        %v627 = vunpack.c.l.b16 %v527
        %v628 = vpack.c.b16 %v625, %v624
        %v629 = vpack.c.b16 %v627, %v626
        %632 = vmatprep.subr.bf16.mxu0 0
        %633 = vmatpush1.bf16.msra.mxu0 0
        %634 = vmatprep.subr.bf16.mxu0 0
        %635 = vmatpush1.bf16.msra.mxu0 0
        %636 = vmatprep.subr.bf16.mxu0 0
        %637 = vmatpush1.bf16.msra.mxu0 0
        %638 = vmatprep.subr.bf16.mxu0 0
        %639 = vmatpush1.bf16.msra.mxu0 0
        %640 = vmatprep.subr.bf16.mxu0 0
        %641 = vmatpush1.bf16.msra.mxu0 0
        %642 = vmatprep.subr.bf16.mxu0 0
        %643 = vmatpush1.bf16.msra.mxu0 0
        %644 = vmatprep.subr.bf16.mxu0 0
        %645 = vmatpush1.bf16.msra.mxu0 %v629
        %646 = vmatprep.subr.bf16.mxu0 0
        %647 = vmatpush1.bf16.msra.mxu0 %v628
        %648 = vmatprep.subr.bf16.mxu0 0
        %649 = vmatpush2.bf16.msra.mxu0 0
        %650 = vmatprep.subr.bf16.mxu0 0
        %651 = vmatpush2.bf16.msra.mxu0 0
        %652 = vmatprep.subr.bf16.mxu0 0
        %653 = vmatpush2.bf16.msra.mxu0 0
        %654 = vmatprep.subr.bf16.mxu0 0
        %655 = vmatpush2.bf16.msra.mxu0 0
        %656 = vmatprep.subr.bf16.mxu0 0
        %657 = vmatpush2.bf16.msra.mxu0 0
        %658 = vmatprep.subr.bf16.mxu0 0
        %659 = vmatpush2.bf16.msra.mxu0 0
        %660 = vmatprep.subr.bf16.mxu0 0
        %661 = vmatpush2.bf16.msra.mxu0 0
        %662 = vmatprep.subr.bf16.mxu0 0
        %663 = vmatpush2.bf16.msra.mxu0 0
        %664 = vmatprep.mubr.bf16.mxu0 0
        %665 = vmatmul.mubr.bf16.gmra.mxu0 %v578
        %v666 = vpop.f32.mrf.mxu0
        %v667 = vadd.f32 %v552, %v666
        %v668 = vpop.f32.mrf.mxu0
        %v669 = vpop.f32.mrf.mxu0
        %v670 = vpop.f32.mrf.mxu0
        %671 = vdwg.mxu0
        %v676 = vunpack.c.l.b16 %v528
        %v677 = vunpack.c.l.b16 %v529
        %v678 = vunpack.c.l.b16 %v530
        %v679 = vunpack.c.l.b16 %v531
        %v680 = vpack.c.b16 %v677, %v676
        %v681 = vpack.c.b16 %v679, %v678
        %684 = vmatprep.subr.bf16.mxu0 0
        %685 = vmatpush1.bf16.msra.mxu0 0
        %686 = vmatprep.subr.bf16.mxu0 0
        %687 = vmatpush1.bf16.msra.mxu0 0
        %688 = vmatprep.subr.bf16.mxu0 0
        %689 = vmatpush1.bf16.msra.mxu0 0
        %690 = vmatprep.subr.bf16.mxu0 0
        %691 = vmatpush1.bf16.msra.mxu0 0
        %692 = vmatprep.subr.bf16.mxu0 0
        %693 = vmatpush1.bf16.msra.mxu0 0
        %694 = vmatprep.subr.bf16.mxu0 0
        %695 = vmatpush1.bf16.msra.mxu0 0
        %696 = vmatprep.subr.bf16.mxu0 0
        %697 = vmatpush1.bf16.msra.mxu0 %v681
        %698 = vmatprep.subr.bf16.mxu0 0
        %699 = vmatpush1.bf16.msra.mxu0 %v680
        %700 = vmatprep.subr.bf16.mxu0 0
        %701 = vmatpush2.bf16.msra.mxu0 0
        %702 = vmatprep.subr.bf16.mxu0 0
        %703 = vmatpush2.bf16.msra.mxu0 0
        %704 = vmatprep.subr.bf16.mxu0 0
        %705 = vmatpush2.bf16.msra.mxu0 0
        %706 = vmatprep.subr.bf16.mxu0 0
        %707 = vmatpush2.bf16.msra.mxu0 0
        %708 = vmatprep.subr.bf16.mxu0 0
        %709 = vmatpush2.bf16.msra.mxu0 0
        %710 = vmatprep.subr.bf16.mxu0 0
        %711 = vmatpush2.bf16.msra.mxu0 0
        %712 = vmatprep.subr.bf16.mxu0 0
        %713 = vmatpush2.bf16.msra.mxu0 0
        %714 = vmatprep.subr.bf16.mxu0 0
        %715 = vmatpush2.bf16.msra.mxu0 0
        %716 = vmatprep.mubr.bf16.mxu0 0
        %717 = vmatmul.mubr.bf16.gmra.mxu0 %v578
        %v718 = vpop.f32.mrf.mxu0
        %v719 = vadd.f32 %v556, %v718
        %v720 = vpop.f32.mrf.mxu0
        %v721 = vpop.f32.mrf.mxu0
        %v722 = vpop.f32.mrf.mxu0
        %723 = vdwg.mxu0
        %v728 = vunpack.c.l.b16 %v532
        %v729 = vunpack.c.l.b16 %v533
        %v730 = vunpack.c.l.b16 %v534
        %v731 = vunpack.c.l.b16 %v535
        %v732 = vpack.c.b16 %v729, %v728
        %v733 = vpack.c.b16 %v731, %v730
        %736 = vmatprep.subr.bf16.mxu0 0
        %737 = vmatpush1.bf16.msra.mxu0 0
        %738 = vmatprep.subr.bf16.mxu0 0
        %739 = vmatpush1.bf16.msra.mxu0 0
        %740 = vmatprep.subr.bf16.mxu0 0
        %741 = vmatpush1.bf16.msra.mxu0 0
        %742 = vmatprep.subr.bf16.mxu0 0
        %743 = vmatpush1.bf16.msra.mxu0 0
        %744 = vmatprep.subr.bf16.mxu0 0
        %745 = vmatpush1.bf16.msra.mxu0 0
        %746 = vmatprep.subr.bf16.mxu0 0
        %747 = vmatpush1.bf16.msra.mxu0 0
        %748 = vmatprep.subr.bf16.mxu0 0
        %749 = vmatpush1.bf16.msra.mxu0 %v733
        %750 = vmatprep.subr.bf16.mxu0 0
        %751 = vmatpush1.bf16.msra.mxu0 %v732
        %752 = vmatprep.subr.bf16.mxu0 0
        %753 = vmatpush2.bf16.msra.mxu0 0
        %754 = vmatprep.subr.bf16.mxu0 0
        %755 = vmatpush2.bf16.msra.mxu0 0
        %756 = vmatprep.subr.bf16.mxu0 0
        %757 = vmatpush2.bf16.msra.mxu0 0
        %758 = vmatprep.subr.bf16.mxu0 0
        %759 = vmatpush2.bf16.msra.mxu0 0
        %760 = vmatprep.subr.bf16.mxu0 0
        %761 = vmatpush2.bf16.msra.mxu0 0
        %762 = vmatprep.subr.bf16.mxu0 0
        %763 = vmatpush2.bf16.msra.mxu0 0
        %764 = vmatprep.subr.bf16.mxu0 0
        %765 = vmatpush2.bf16.msra.mxu0 0
        %766 = vmatprep.subr.bf16.mxu0 0
        %767 = vmatpush2.bf16.msra.mxu0 0
        %768 = vmatprep.mubr.bf16.mxu0 0
        %769 = vmatmul.mubr.bf16.gmra.mxu0 %v578
        %v770 = vpop.f32.mrf.mxu0
        %v771 = vadd.f32 %v560, %v770
        %v772 = vpop.f32.mrf.mxu0
        %v773 = vpop.f32.mrf.mxu0
        %v774 = vpop.f32.mrf.mxu0
        %775 = vdwg.mxu0
        %v776 = vld [vmem:[%s253] sm:$0xff]
        %v777 = vpack.c.bf16 %v776, %v776
        %s778 = scalar_lea.vmem %s3, 128
        %v779 = vld [vmem:[%s778] sm:$0xf]
        %v780 = vld [vmem:[%s778 + $0x4] sm:$0xf]
        %v781 = vld [vmem:[%s778 + $0x8] sm:$0xf]
        %v782 = vld [vmem:[%s778 + $0xc] sm:$0xf]
        %v783 = vld [vmem:[%s778 + $0x10] sm:$0xf]
        %v784 = vld [vmem:[%s778 + $0x14] sm:$0xf]
        %v785 = vld [vmem:[%s778 + $0x18] sm:$0xf]
        %v786 = vld [vmem:[%s778 + $0x1c] sm:$0xf]
        %v787 = vld [vmem:[%s778 + $0x20] sm:$0xf]
        %v788 = vld [vmem:[%s778 + $0x24] sm:$0xf]
        %v789 = vld [vmem:[%s778 + $0x28] sm:$0xf]
        %v790 = vld [vmem:[%s778 + $0x2c] sm:$0xf]
        %v791 = vld [vmem:[%s778 + $0x30] sm:$0xf]
        %v792 = vld [vmem:[%s778 + $0x34] sm:$0xf]
        %v793 = vld [vmem:[%s778 + $0x38] sm:$0xf]
        %v794 = vld [vmem:[%s778 + $0x3c] sm:$0xf]
        %s795 = scalar_lea.vmem %s4, 8
        %v796 = vld [vmem:[%s795] sm:$0x1]
        %v797 = vld [vmem:[%s795 + $0x1] sm:$0x1]
        %v798 = vld [vmem:[%s795 + $0x2] sm:$0x1]
        %v799 = vld [vmem:[%s795 + $0x3] sm:$0x1]
        %v804 = vlaneseq
        %v805 = vshrl.u32 %v804, 7
        %v806 = vsub.s32 0, %v805
        %v807 = vrot.slane %v796, %v806
        %v808 = vlaneseq
        %v809 = vshrl.u32 %v808, 7
        %v810 = vsub.s32 0, %v809
        %v811 = vrot.slane %v797, %v810
        %v812 = vlaneseq
        %v813 = vshrl.u32 %v812, 7
        %v814 = vsub.s32 0, %v813
        %v815 = vrot.slane %v798, %v814
        %v816 = vlaneseq
        %v817 = vshrl.u32 %v816, 7
        %v818 = vsub.s32 0, %v817
        %v819 = vrot.slane %v799, %v818
        %v828 = vunpack.c.l.b16 %v779
        %v829 = vunpack.c.l.b16 %v780
        %v830 = vunpack.c.l.b16 %v781
        %v831 = vunpack.c.l.b16 %v782
        %v832 = vpack.c.b16 %v829, %v828
        %v833 = vpack.c.b16 %v831, %v830
        %v837 = vsel %vm313, %v777, 0
        %839 = vmatprep.subr.bf16.mxu0 0
        %840 = vmatpush1.bf16.msra.mxu0 0
        %841 = vmatprep.subr.bf16.mxu0 0
        %842 = vmatpush1.bf16.msra.mxu0 0
        %843 = vmatprep.subr.bf16.mxu0 0
        %844 = vmatpush1.bf16.msra.mxu0 0
        %845 = vmatprep.subr.bf16.mxu0 0
        %846 = vmatpush1.bf16.msra.mxu0 0
        %847 = vmatprep.subr.bf16.mxu0 0
        %848 = vmatpush1.bf16.msra.mxu0 0
        %849 = vmatprep.subr.bf16.mxu0 0
        %850 = vmatpush1.bf16.msra.mxu0 0
        %851 = vmatprep.subr.bf16.mxu0 0
        %852 = vmatpush1.bf16.msra.mxu0 %v833
        %853 = vmatprep.subr.bf16.mxu0 0
        %854 = vmatpush1.bf16.msra.mxu0 %v832
        %855 = vmatprep.subr.bf16.mxu0 0
        %856 = vmatpush2.bf16.msra.mxu0 0
        %857 = vmatprep.subr.bf16.mxu0 0
        %858 = vmatpush2.bf16.msra.mxu0 0
        %859 = vmatprep.subr.bf16.mxu0 0
        %860 = vmatpush2.bf16.msra.mxu0 0
        %861 = vmatprep.subr.bf16.mxu0 0
        %862 = vmatpush2.bf16.msra.mxu0 0
        %863 = vmatprep.subr.bf16.mxu0 0
        %864 = vmatpush2.bf16.msra.mxu0 0
        %865 = vmatprep.subr.bf16.mxu0 0
        %866 = vmatpush2.bf16.msra.mxu0 0
        %867 = vmatprep.subr.bf16.mxu0 0
        %868 = vmatpush2.bf16.msra.mxu0 0
        %869 = vmatprep.subr.bf16.mxu0 0
        %870 = vmatpush2.bf16.msra.mxu0 0
        %871 = vmatprep.mubr.bf16.mxu0 0
        %872 = vmatmul.mubr.bf16.gmra.mxu0 %v837
        %v873 = vpop.f32.mrf.mxu0
        %v874 = vadd.f32 %v807, %v873
        %v875 = vpop.f32.mrf.mxu0
        %v876 = vpop.f32.mrf.mxu0
        %v877 = vpop.f32.mrf.mxu0
        %878 = vdwg.mxu0
        %v883 = vunpack.c.l.b16 %v783
        %v884 = vunpack.c.l.b16 %v784
        %v885 = vunpack.c.l.b16 %v785
        %v886 = vunpack.c.l.b16 %v786
        %v887 = vpack.c.b16 %v884, %v883
        %v888 = vpack.c.b16 %v886, %v885
        %891 = vmatprep.subr.bf16.mxu0 0
        %892 = vmatpush1.bf16.msra.mxu0 0
        %893 = vmatprep.subr.bf16.mxu0 0
        %894 = vmatpush1.bf16.msra.mxu0 0
        %895 = vmatprep.subr.bf16.mxu0 0
        %896 = vmatpush1.bf16.msra.mxu0 0
        %897 = vmatprep.subr.bf16.mxu0 0
        %898 = vmatpush1.bf16.msra.mxu0 0
        %899 = vmatprep.subr.bf16.mxu0 0
        %900 = vmatpush1.bf16.msra.mxu0 0
        %901 = vmatprep.subr.bf16.mxu0 0
        %902 = vmatpush1.bf16.msra.mxu0 0
        %903 = vmatprep.subr.bf16.mxu0 0
        %904 = vmatpush1.bf16.msra.mxu0 %v888
        %905 = vmatprep.subr.bf16.mxu0 0
        %906 = vmatpush1.bf16.msra.mxu0 %v887
        %907 = vmatprep.subr.bf16.mxu0 0
        %908 = vmatpush2.bf16.msra.mxu0 0
        %909 = vmatprep.subr.bf16.mxu0 0
        %910 = vmatpush2.bf16.msra.mxu0 0
        %911 = vmatprep.subr.bf16.mxu0 0
        %912 = vmatpush2.bf16.msra.mxu0 0
        %913 = vmatprep.subr.bf16.mxu0 0
        %914 = vmatpush2.bf16.msra.mxu0 0
        %915 = vmatprep.subr.bf16.mxu0 0
        %916 = vmatpush2.bf16.msra.mxu0 0
        %917 = vmatprep.subr.bf16.mxu0 0
        %918 = vmatpush2.bf16.msra.mxu0 0
        %919 = vmatprep.subr.bf16.mxu0 0
        %920 = vmatpush2.bf16.msra.mxu0 0
        %921 = vmatprep.subr.bf16.mxu0 0
        %922 = vmatpush2.bf16.msra.mxu0 0
        %923 = vmatprep.mubr.bf16.mxu0 0
        %924 = vmatmul.mubr.bf16.gmra.mxu0 %v837
        %v925 = vpop.f32.mrf.mxu0
        %v926 = vadd.f32 %v811, %v925
        %v927 = vpop.f32.mrf.mxu0
        %v928 = vpop.f32.mrf.mxu0
        %v929 = vpop.f32.mrf.mxu0
        %930 = vdwg.mxu0
        %v935 = vunpack.c.l.b16 %v787
        %v936 = vunpack.c.l.b16 %v788
        %v937 = vunpack.c.l.b16 %v789
        %v938 = vunpack.c.l.b16 %v790
        %v939 = vpack.c.b16 %v936, %v935
        %v940 = vpack.c.b16 %v938, %v937
        %943 = vmatprep.subr.bf16.mxu0 0
        %944 = vmatpush1.bf16.msra.mxu0 0
        %945 = vmatprep.subr.bf16.mxu0 0
        %946 = vmatpush1.bf16.msra.mxu0 0
        %947 = vmatprep.subr.bf16.mxu0 0
        %948 = vmatpush1.bf16.msra.mxu0 0
        %949 = vmatprep.subr.bf16.mxu0 0
        %950 = vmatpush1.bf16.msra.mxu0 0
        %951 = vmatprep.subr.bf16.mxu0 0
        %952 = vmatpush1.bf16.msra.mxu0 0
        %953 = vmatprep.subr.bf16.mxu0 0
        %954 = vmatpush1.bf16.msra.mxu0 0
        %955 = vmatprep.subr.bf16.mxu0 0
        %956 = vmatpush1.bf16.msra.mxu0 %v940
        %957 = vmatprep.subr.bf16.mxu0 0
        %958 = vmatpush1.bf16.msra.mxu0 %v939
        %959 = vmatprep.subr.bf16.mxu0 0
        %960 = vmatpush2.bf16.msra.mxu0 0
        %961 = vmatprep.subr.bf16.mxu0 0
        %962 = vmatpush2.bf16.msra.mxu0 0
        %963 = vmatprep.subr.bf16.mxu0 0
        %964 = vmatpush2.bf16.msra.mxu0 0
        %965 = vmatprep.subr.bf16.mxu0 0
        %966 = vmatpush2.bf16.msra.mxu0 0
        %967 = vmatprep.subr.bf16.mxu0 0
        %968 = vmatpush2.bf16.msra.mxu0 0
        %969 = vmatprep.subr.bf16.mxu0 0
        %970 = vmatpush2.bf16.msra.mxu0 0
        %971 = vmatprep.subr.bf16.mxu0 0
        %972 = vmatpush2.bf16.msra.mxu0 0
        %973 = vmatprep.subr.bf16.mxu0 0
        %974 = vmatpush2.bf16.msra.mxu0 0
        %975 = vmatprep.mubr.bf16.mxu0 0
        %976 = vmatmul.mubr.bf16.gmra.mxu0 %v837
        %v977 = vpop.f32.mrf.mxu0
        %v978 = vadd.f32 %v815, %v977
        %v979 = vpop.f32.mrf.mxu0
        %v980 = vpop.f32.mrf.mxu0
        %v981 = vpop.f32.mrf.mxu0
        %982 = vdwg.mxu0
        %v987 = vunpack.c.l.b16 %v791
        %v988 = vunpack.c.l.b16 %v792
        %v989 = vunpack.c.l.b16 %v793
        %v990 = vunpack.c.l.b16 %v794
        %v991 = vpack.c.b16 %v988, %v987
        %v992 = vpack.c.b16 %v990, %v989
        %995 = vmatprep.subr.bf16.mxu0 0
        %996 = vmatpush1.bf16.msra.mxu0 0
        %997 = vmatprep.subr.bf16.mxu0 0
        %998 = vmatpush1.bf16.msra.mxu0 0
        %999 = vmatprep.subr.bf16.mxu0 0
        %1000 = vmatpush1.bf16.msra.mxu0 0
        %1001 = vmatprep.subr.bf16.mxu0 0
        %1002 = vmatpush1.bf16.msra.mxu0 0
        %1003 = vmatprep.subr.bf16.mxu0 0
        %1004 = vmatpush1.bf16.msra.mxu0 0
        %1005 = vmatprep.subr.bf16.mxu0 0
        %1006 = vmatpush1.bf16.msra.mxu0 0
        %1007 = vmatprep.subr.bf16.mxu0 0
        %1008 = vmatpush1.bf16.msra.mxu0 %v992
        %1009 = vmatprep.subr.bf16.mxu0 0
        %1010 = vmatpush1.bf16.msra.mxu0 %v991
        %1011 = vmatprep.subr.bf16.mxu0 0
        %1012 = vmatpush2.bf16.msra.mxu0 0
        %1013 = vmatprep.subr.bf16.mxu0 0
        %1014 = vmatpush2.bf16.msra.mxu0 0
        %1015 = vmatprep.subr.bf16.mxu0 0
        %1016 = vmatpush2.bf16.msra.mxu0 0
        %1017 = vmatprep.subr.bf16.mxu0 0
        %1018 = vmatpush2.bf16.msra.mxu0 0
        %1019 = vmatprep.subr.bf16.mxu0 0
        %1020 = vmatpush2.bf16.msra.mxu0 0
        %1021 = vmatprep.subr.bf16.mxu0 0
        %1022 = vmatpush2.bf16.msra.mxu0 0
        %1023 = vmatprep.subr.bf16.mxu0 0
        %1024 = vmatpush2.bf16.msra.mxu0 0
        %1025 = vmatprep.subr.bf16.mxu0 0
        %1026 = vmatpush2.bf16.msra.mxu0 0
        %1027 = vmatprep.mubr.bf16.mxu0 0
        %1028 = vmatmul.mubr.bf16.gmra.mxu0 %v837
        %v1029 = vpop.f32.mrf.mxu0
        %v1030 = vadd.f32 %v819, %v1029
        %v1031 = vpop.f32.mrf.mxu0
        %v1032 = vpop.f32.mrf.mxu0
        %v1033 = vpop.f32.mrf.mxu0
        %1034 = vdwg.mxu0
        %vm1035 = vcmask 64512
        %v1037 = vsel %vm1035, %v513, 0
        %v1040 = vsel %vm1035, %v615, 0
        %1042 = vmatprep.subr.mxu0 0.0
        %1043 = vmatpush1.xpose.msra.mxu0 0.0
        %1044 = vmatprep.subr.mxu0 0.0
        %1045 = vmatpush1.xpose.msra.mxu0 0.0
        %1046 = vmatprep.subr.mxu0 0.0
        %1047 = vmatpush1.xpose.msra.mxu0 0.0
        %1048 = vmatprep.subr.mxu0 0.0
        %1049 = vmatpush1.xpose.msra.mxu0 0.0
        %1050 = vmatprep.subr.mxu0 0.0
        %1051 = vmatpush1.xpose.msra.mxu0 0.0
        %1052 = vmatprep.subr.mxu0 0.0
        %1053 = vmatpush1.xpose.msra.mxu0 0.0
        %1054 = vmatprep.subr.mxu0 0.0
        %1055 = vmatpush1.xpose.msra.mxu0 0.0
        %1056 = vmatprep.subr.mxu0 0.0
        %1057 = vmatpush1.xpose.msra.mxu0 0.0
        %1058 = vmatprep.subr.mxu0 0.0
        %1059 = vmatpush1.xpose.msra.mxu0 0.0
        %1060 = vmatprep.subr.mxu0 0.0
        %1061 = vmatpush1.xpose.msra.mxu0 0.0
        %1062 = vmatprep.subr.mxu0 0.0
        %1063 = vmatpush1.xpose.msra.mxu0 0.0
        %1064 = vmatprep.subr.mxu0 0.0
        %1065 = vmatpush1.xpose.msra.mxu0 0.0
        %1066 = vmatprep.subr.mxu0 0.0
        %1067 = vmatpush1.xpose.msra.mxu0 0.0
        %1068 = vmatprep.subr.mxu0 0.0
        %1069 = vmatpush1.xpose.msra.mxu0 0.0
        %1070 = vmatprep.subr.mxu0 0.0
        %1071 = vmatpush1.xpose.msra.mxu0 0.0
        %1072 = vmatprep.subr.mxu0 0.0
        %1073 = vmatpush1.xpose.msra.mxu0 %v1040
        %1074 = vmatprep.subr.mxu0 0.0
        %1075 = vmatpush2.xpose.msra.mxu0 0.0
        %1076 = vmatprep.subr.mxu0 0.0
        %1077 = vmatpush2.xpose.msra.mxu0 0.0
        %1078 = vmatprep.subr.mxu0 0.0
        %1079 = vmatpush2.xpose.msra.mxu0 0.0
        %1080 = vmatprep.subr.mxu0 0.0
        %1081 = vmatpush2.xpose.msra.mxu0 0.0
        %1082 = vmatprep.subr.mxu0 0.0
        %1083 = vmatpush2.xpose.msra.mxu0 0.0
        %1084 = vmatprep.subr.mxu0 0.0
        %1085 = vmatpush2.xpose.msra.mxu0 0.0
        %1086 = vmatprep.subr.mxu0 0.0
        %1087 = vmatpush2.xpose.msra.mxu0 0.0
        %1088 = vmatprep.subr.mxu0 0.0
        %1089 = vmatpush2.xpose.msra.mxu0 0.0
        %1090 = vmatprep.subr.mxu0 0.0
        %1091 = vmatpush2.xpose.msra.mxu0 0.0
        %1092 = vmatprep.subr.mxu0 0.0
        %1093 = vmatpush2.xpose.msra.mxu0 0.0
        %1094 = vmatprep.subr.mxu0 0.0
        %1095 = vmatpush2.xpose.msra.mxu0 0.0
        %1096 = vmatprep.subr.mxu0 0.0
        %1097 = vmatpush2.xpose.msra.mxu0 0.0
        %1098 = vmatprep.subr.mxu0 0.0
        %1099 = vmatpush2.xpose.msra.mxu0 0.0
        %1100 = vmatprep.subr.mxu0 0.0
        %1101 = vmatpush2.xpose.msra.mxu0 0.0
        %1102 = vmatprep.subr.mxu0 0.0
        %1103 = vmatpush2.xpose.msra.mxu0 0.0
        %1104 = vmatprep.subr.mxu0 0.0
        %1105 = vmatpush2.xpose.msra.mxu0 0.0
        %1106 = vmatprep.mubr.f32.mxu0 0.0
        %1107 = vmatmul.mubr.f32.gmra.mxu0 %v1037
        %v1108 = vpop.f32.mrf.mxu0
        %v1109 = vadd.f32 0.0, %v1108
        %v1110 = vpop.f32.mrf.mxu0
        %1111 = vdwg.mxu0
        %v1113 = vsel %vm1035, %v514, 0
        %v1116 = vsel %vm1035, %v667, 0
        %1118 = vmatprep.subr.mxu0 0.0
        %1119 = vmatpush1.xpose.msra.mxu0 0.0
        %1120 = vmatprep.subr.mxu0 0.0
        %1121 = vmatpush1.xpose.msra.mxu0 0.0
        %1122 = vmatprep.subr.mxu0 0.0
        %1123 = vmatpush1.xpose.msra.mxu0 0.0
        %1124 = vmatprep.subr.mxu0 0.0
        %1125 = vmatpush1.xpose.msra.mxu0 0.0
        %1126 = vmatprep.subr.mxu0 0.0
        %1127 = vmatpush1.xpose.msra.mxu0 0.0
        %1128 = vmatprep.subr.mxu0 0.0
        %1129 = vmatpush1.xpose.msra.mxu0 0.0
        %1130 = vmatprep.subr.mxu0 0.0
        %1131 = vmatpush1.xpose.msra.mxu0 0.0
        %1132 = vmatprep.subr.mxu0 0.0
        %1133 = vmatpush1.xpose.msra.mxu0 0.0
        %1134 = vmatprep.subr.mxu0 0.0
        %1135 = vmatpush1.xpose.msra.mxu0 0.0
        %1136 = vmatprep.subr.mxu0 0.0
        %1137 = vmatpush1.xpose.msra.mxu0 0.0
        %1138 = vmatprep.subr.mxu0 0.0
        %1139 = vmatpush1.xpose.msra.mxu0 0.0
        %1140 = vmatprep.subr.mxu0 0.0
        %1141 = vmatpush1.xpose.msra.mxu0 0.0
        %1142 = vmatprep.subr.mxu0 0.0
        %1143 = vmatpush1.xpose.msra.mxu0 0.0
        %1144 = vmatprep.subr.mxu0 0.0
        %1145 = vmatpush1.xpose.msra.mxu0 0.0
        %1146 = vmatprep.subr.mxu0 0.0
        %1147 = vmatpush1.xpose.msra.mxu0 0.0
        %1148 = vmatprep.subr.mxu0 0.0
        %1149 = vmatpush1.xpose.msra.mxu0 %v1116
        %1150 = vmatprep.subr.mxu0 0.0
        %1151 = vmatpush2.xpose.msra.mxu0 0.0
        %1152 = vmatprep.subr.mxu0 0.0
        %1153 = vmatpush2.xpose.msra.mxu0 0.0
        %1154 = vmatprep.subr.mxu0 0.0
        %1155 = vmatpush2.xpose.msra.mxu0 0.0
        %1156 = vmatprep.subr.mxu0 0.0
        %1157 = vmatpush2.xpose.msra.mxu0 0.0
        %1158 = vmatprep.subr.mxu0 0.0
        %1159 = vmatpush2.xpose.msra.mxu0 0.0
        %1160 = vmatprep.subr.mxu0 0.0
        %1161 = vmatpush2.xpose.msra.mxu0 0.0
        %1162 = vmatprep.subr.mxu0 0.0
        %1163 = vmatpush2.xpose.msra.mxu0 0.0
        %1164 = vmatprep.subr.mxu0 0.0
        %1165 = vmatpush2.xpose.msra.mxu0 0.0
        %1166 = vmatprep.subr.mxu0 0.0
        %1167 = vmatpush2.xpose.msra.mxu0 0.0
        %1168 = vmatprep.subr.mxu0 0.0
        %1169 = vmatpush2.xpose.msra.mxu0 0.0
        %1170 = vmatprep.subr.mxu0 0.0
        %1171 = vmatpush2.xpose.msra.mxu0 0.0
        %1172 = vmatprep.subr.mxu0 0.0
        %1173 = vmatpush2.xpose.msra.mxu0 0.0
        %1174 = vmatprep.subr.mxu0 0.0
        %1175 = vmatpush2.xpose.msra.mxu0 0.0
        %1176 = vmatprep.subr.mxu0 0.0
        %1177 = vmatpush2.xpose.msra.mxu0 0.0
        %1178 = vmatprep.subr.mxu0 0.0
        %1179 = vmatpush2.xpose.msra.mxu0 0.0
        %1180 = vmatprep.subr.mxu0 0.0
        %1181 = vmatpush2.xpose.msra.mxu0 0.0
        %1182 = vmatprep.mubr.f32.mxu0 0.0
        %1183 = vmatmul.mubr.f32.gmra.mxu0 %v1113
        %v1184 = vpop.f32.mrf.mxu0
        %v1185 = vadd.f32 0.0, %v1184
        %v1186 = vpop.f32.mrf.mxu0
        %1187 = vdwg.mxu0
        %v1189 = vsel %vm1035, %v515, 0
        %v1192 = vsel %vm1035, %v719, 0
        %1194 = vmatprep.subr.mxu0 0.0
        %1195 = vmatpush1.xpose.msra.mxu0 0.0
        %1196 = vmatprep.subr.mxu0 0.0
        %1197 = vmatpush1.xpose.msra.mxu0 0.0
        %1198 = vmatprep.subr.mxu0 0.0
        %1199 = vmatpush1.xpose.msra.mxu0 0.0
        %1200 = vmatprep.subr.mxu0 0.0
        %1201 = vmatpush1.xpose.msra.mxu0 0.0
        %1202 = vmatprep.subr.mxu0 0.0
        %1203 = vmatpush1.xpose.msra.mxu0 0.0
        %1204 = vmatprep.subr.mxu0 0.0
        %1205 = vmatpush1.xpose.msra.mxu0 0.0
        %1206 = vmatprep.subr.mxu0 0.0
        %1207 = vmatpush1.xpose.msra.mxu0 0.0
        %1208 = vmatprep.subr.mxu0 0.0
        %1209 = vmatpush1.xpose.msra.mxu0 0.0
        %1210 = vmatprep.subr.mxu0 0.0
        %1211 = vmatpush1.xpose.msra.mxu0 0.0
        %1212 = vmatprep.subr.mxu0 0.0
        %1213 = vmatpush1.xpose.msra.mxu0 0.0
        %1214 = vmatprep.subr.mxu0 0.0
        %1215 = vmatpush1.xpose.msra.mxu0 0.0
        %1216 = vmatprep.subr.mxu0 0.0
        %1217 = vmatpush1.xpose.msra.mxu0 0.0
        %1218 = vmatprep.subr.mxu0 0.0
        %1219 = vmatpush1.xpose.msra.mxu0 0.0
        %1220 = vmatprep.subr.mxu0 0.0
        %1221 = vmatpush1.xpose.msra.mxu0 0.0
        %1222 = vmatprep.subr.mxu0 0.0
        %1223 = vmatpush1.xpose.msra.mxu0 0.0
        %1224 = vmatprep.subr.mxu0 0.0
        %1225 = vmatpush1.xpose.msra.mxu0 %v1192
        %1226 = vmatprep.subr.mxu0 0.0
        %1227 = vmatpush2.xpose.msra.mxu0 0.0
        %1228 = vmatprep.subr.mxu0 0.0
        %1229 = vmatpush2.xpose.msra.mxu0 0.0
        %1230 = vmatprep.subr.mxu0 0.0
        %1231 = vmatpush2.xpose.msra.mxu0 0.0
        %1232 = vmatprep.subr.mxu0 0.0
        %1233 = vmatpush2.xpose.msra.mxu0 0.0
        %1234 = vmatprep.subr.mxu0 0.0
        %1235 = vmatpush2.xpose.msra.mxu0 0.0
        %1236 = vmatprep.subr.mxu0 0.0
        %1237 = vmatpush2.xpose.msra.mxu0 0.0
        %1238 = vmatprep.subr.mxu0 0.0
        %1239 = vmatpush2.xpose.msra.mxu0 0.0
        %1240 = vmatprep.subr.mxu0 0.0
        %1241 = vmatpush2.xpose.msra.mxu0 0.0
        %1242 = vmatprep.subr.mxu0 0.0
        %1243 = vmatpush2.xpose.msra.mxu0 0.0
        %1244 = vmatprep.subr.mxu0 0.0
        %1245 = vmatpush2.xpose.msra.mxu0 0.0
        %1246 = vmatprep.subr.mxu0 0.0
        %1247 = vmatpush2.xpose.msra.mxu0 0.0
        %1248 = vmatprep.subr.mxu0 0.0
        %1249 = vmatpush2.xpose.msra.mxu0 0.0
        %1250 = vmatprep.subr.mxu0 0.0
        %1251 = vmatpush2.xpose.msra.mxu0 0.0
        %1252 = vmatprep.subr.mxu0 0.0
        %1253 = vmatpush2.xpose.msra.mxu0 0.0
        %1254 = vmatprep.subr.mxu0 0.0
        %1255 = vmatpush2.xpose.msra.mxu0 0.0
        %1256 = vmatprep.subr.mxu0 0.0
        %1257 = vmatpush2.xpose.msra.mxu0 0.0
        %1258 = vmatprep.mubr.f32.mxu0 0.0
        %1259 = vmatmul.mubr.f32.gmra.mxu0 %v1189
        %v1260 = vpop.f32.mrf.mxu0
        %v1261 = vadd.f32 0.0, %v1260
        %v1262 = vpop.f32.mrf.mxu0
        %1263 = vdwg.mxu0
        %v1265 = vsel %vm1035, %v516, 0
        %v1268 = vsel %vm1035, %v771, 0
        %1270 = vmatprep.subr.mxu0 0.0
        %1271 = vmatpush1.xpose.msra.mxu0 0.0
        %1272 = vmatprep.subr.mxu0 0.0
        %1273 = vmatpush1.xpose.msra.mxu0 0.0
        %1274 = vmatprep.subr.mxu0 0.0
        %1275 = vmatpush1.xpose.msra.mxu0 0.0
        %1276 = vmatprep.subr.mxu0 0.0
        %1277 = vmatpush1.xpose.msra.mxu0 0.0
        %1278 = vmatprep.subr.mxu0 0.0
        %1279 = vmatpush1.xpose.msra.mxu0 0.0
        %1280 = vmatprep.subr.mxu0 0.0
        %1281 = vmatpush1.xpose.msra.mxu0 0.0
        %1282 = vmatprep.subr.mxu0 0.0
        %1283 = vmatpush1.xpose.msra.mxu0 0.0
        %1284 = vmatprep.subr.mxu0 0.0
        %1285 = vmatpush1.xpose.msra.mxu0 0.0
        %1286 = vmatprep.subr.mxu0 0.0
        %1287 = vmatpush1.xpose.msra.mxu0 0.0
        %1288 = vmatprep.subr.mxu0 0.0
        %1289 = vmatpush1.xpose.msra.mxu0 0.0
        %1290 = vmatprep.subr.mxu0 0.0
        %1291 = vmatpush1.xpose.msra.mxu0 0.0
        %1292 = vmatprep.subr.mxu0 0.0
        %1293 = vmatpush1.xpose.msra.mxu0 0.0
        %1294 = vmatprep.subr.mxu0 0.0
        %1295 = vmatpush1.xpose.msra.mxu0 0.0
        %1296 = vmatprep.subr.mxu0 0.0
        %1297 = vmatpush1.xpose.msra.mxu0 0.0
        %1298 = vmatprep.subr.mxu0 0.0
        %1299 = vmatpush1.xpose.msra.mxu0 0.0
        %1300 = vmatprep.subr.mxu0 0.0
        %1301 = vmatpush1.xpose.msra.mxu0 %v1268
        %1302 = vmatprep.subr.mxu0 0.0
        %1303 = vmatpush2.xpose.msra.mxu0 0.0
        %1304 = vmatprep.subr.mxu0 0.0
        %1305 = vmatpush2.xpose.msra.mxu0 0.0
        %1306 = vmatprep.subr.mxu0 0.0
        %1307 = vmatpush2.xpose.msra.mxu0 0.0
        %1308 = vmatprep.subr.mxu0 0.0
        %1309 = vmatpush2.xpose.msra.mxu0 0.0
        %1310 = vmatprep.subr.mxu0 0.0
        %1311 = vmatpush2.xpose.msra.mxu0 0.0
        %1312 = vmatprep.subr.mxu0 0.0
        %1313 = vmatpush2.xpose.msra.mxu0 0.0
        %1314 = vmatprep.subr.mxu0 0.0
        %1315 = vmatpush2.xpose.msra.mxu0 0.0
        %1316 = vmatprep.subr.mxu0 0.0
        %1317 = vmatpush2.xpose.msra.mxu0 0.0
        %1318 = vmatprep.subr.mxu0 0.0
        %1319 = vmatpush2.xpose.msra.mxu0 0.0
        %1320 = vmatprep.subr.mxu0 0.0
        %1321 = vmatpush2.xpose.msra.mxu0 0.0
        %1322 = vmatprep.subr.mxu0 0.0
        %1323 = vmatpush2.xpose.msra.mxu0 0.0
        %1324 = vmatprep.subr.mxu0 0.0
        %1325 = vmatpush2.xpose.msra.mxu0 0.0
        %1326 = vmatprep.subr.mxu0 0.0
        %1327 = vmatpush2.xpose.msra.mxu0 0.0
        %1328 = vmatprep.subr.mxu0 0.0
        %1329 = vmatpush2.xpose.msra.mxu0 0.0
        %1330 = vmatprep.subr.mxu0 0.0
        %1331 = vmatpush2.xpose.msra.mxu0 0.0
        %1332 = vmatprep.subr.mxu0 0.0
        %1333 = vmatpush2.xpose.msra.mxu0 0.0
        %1334 = vmatprep.mubr.f32.mxu0 0.0
        %1335 = vmatmul.mubr.f32.gmra.mxu0 %v1265
        %v1336 = vpop.f32.mrf.mxu0
        %v1337 = vadd.f32 0.0, %v1336
        %v1338 = vpop.f32.mrf.mxu0
        %1339 = vdwg.mxu0
        %v1340 = vsel %vm1035, %v1109, -inf
        %1341 = vmax.xlane.f32.xlu0 %v1340
        %v1342 = vpop.xlane.xlu0 %1341
        %v1343 = vsel %vm1035, %v1185, -inf
        %1344 = vmax.xlane.f32.xlu0 %v1343
        %v1345 = vpop.xlane.xlu0 %1344
        %v1346 = vsel %vm1035, %v1261, -inf
        %1347 = vmax.xlane.f32.xlu0 %v1346
        %v1348 = vpop.xlane.xlu0 %1347
        %v1349 = vsel %vm1035, %v1337, -inf
        %1350 = vmax.xlane.f32.xlu0 %v1349
        %v1351 = vpop.xlane.xlu0 %1350
        %v1352 = vsub.f32 %v1109, %v1342
        %v1353 = vsub.f32 %v1185, %v1345
        %v1354 = vsub.f32 %v1261, %v1348
        %v1355 = vsub.f32 %v1337, %v1351
        %v1356 = vmul.f32 %v1352, 1.442695
        %v1357 = vpow.pop %v1356
        %v1358 = vmul.f32 %v1353, 1.442695
        %v1359 = vpow.pop %v1358
        %v1360 = vmul.f32 %v1354, 1.442695
        %v1361 = vpow.pop %v1360
        %v1362 = vmul.f32 %v1355, 1.442695
        %v1363 = vpow.pop %v1362
        %v1364 = vsel %vm1035, %v1357, 0.0
        %1365 = vadd.xlane.f32.xlu0 %v1364
        %v1366 = vpop.xlane.xlu0 %1365
        %v1367 = vsel %vm1035, %v1359, 0.0
        %1368 = vadd.xlane.f32.xlu0 %v1367
        %v1369 = vpop.xlane.xlu0 %1368
        %v1370 = vsel %vm1035, %v1361, 0.0
        %1371 = vadd.xlane.f32.xlu0 %v1370
        %v1372 = vpop.xlane.xlu0 %1371
        %v1373 = vsel %vm1035, %v1363, 0.0
        %1374 = vadd.xlane.f32.xlu0 %v1373
        %v1375 = vpop.xlane.xlu0 %1374
        %v1376 = vrcp.pop %v1366
        %v1377 = vmul.f32 %v1357, %v1376
        %v1378 = vrcp.pop %v1369
        %v1379 = vmul.f32 %v1359, %v1378
        %v1380 = vrcp.pop %v1372
        %v1381 = vmul.f32 %v1361, %v1380
        %v1382 = vrcp.pop %v1375
        %v1383 = vmul.f32 %v1363, %v1382
        %v1385 = vsel %vm1035, %v1377, 0
        %1387 = vmatprep.subr.mxu0 0.0
        %1388 = vmatpush1.msra.mxu0 0.0
        %1389 = vmatprep.subr.mxu0 0.0
        %1390 = vmatpush1.msra.mxu0 0.0
        %1391 = vmatprep.subr.mxu0 0.0
        %1392 = vmatpush1.msra.mxu0 0.0
        %1393 = vmatprep.subr.mxu0 0.0
        %1394 = vmatpush1.msra.mxu0 0.0
        %1395 = vmatprep.subr.mxu0 0.0
        %1396 = vmatpush1.msra.mxu0 0.0
        %1397 = vmatprep.subr.mxu0 0.0
        %1398 = vmatpush1.msra.mxu0 0.0
        %1399 = vmatprep.subr.mxu0 0.0
        %1400 = vmatpush1.msra.mxu0 0.0
        %1401 = vmatprep.subr.mxu0 0.0
        %1402 = vmatpush1.msra.mxu0 0.0
        %1403 = vmatprep.subr.mxu0 0.0
        %1404 = vmatpush1.msra.mxu0 0.0
        %1405 = vmatprep.subr.mxu0 0.0
        %1406 = vmatpush1.msra.mxu0 0.0
        %1407 = vmatprep.subr.mxu0 0.0
        %1408 = vmatpush1.msra.mxu0 0.0
        %1409 = vmatprep.subr.mxu0 0.0
        %1410 = vmatpush1.msra.mxu0 0.0
        %1411 = vmatprep.subr.mxu0 0.0
        %1412 = vmatpush1.msra.mxu0 0.0
        %1413 = vmatprep.subr.mxu0 0.0
        %1414 = vmatpush1.msra.mxu0 0.0
        %1415 = vmatprep.subr.mxu0 0.0
        %1416 = vmatpush1.msra.mxu0 0.0
        %1417 = vmatprep.subr.mxu0 0.0
        %1418 = vmatpush1.msra.mxu0 %v874
        %1419 = vmatprep.subr.mxu0 0.0
        %1420 = vmatpush2.msra.mxu0 0.0
        %1421 = vmatprep.subr.mxu0 0.0
        %1422 = vmatpush2.msra.mxu0 0.0
        %1423 = vmatprep.subr.mxu0 0.0
        %1424 = vmatpush2.msra.mxu0 0.0
        %1425 = vmatprep.subr.mxu0 0.0
        %1426 = vmatpush2.msra.mxu0 0.0
        %1427 = vmatprep.subr.mxu0 0.0
        %1428 = vmatpush2.msra.mxu0 0.0
        %1429 = vmatprep.subr.mxu0 0.0
        %1430 = vmatpush2.msra.mxu0 0.0
        %1431 = vmatprep.subr.mxu0 0.0
        %1432 = vmatpush2.msra.mxu0 0.0
        %1433 = vmatprep.subr.mxu0 0.0
        %1434 = vmatpush2.msra.mxu0 0.0
        %1435 = vmatprep.subr.mxu0 0.0
        %1436 = vmatpush2.msra.mxu0 0.0
        %1437 = vmatprep.subr.mxu0 0.0
        %1438 = vmatpush2.msra.mxu0 0.0
        %1439 = vmatprep.subr.mxu0 0.0
        %1440 = vmatpush2.msra.mxu0 0.0
        %1441 = vmatprep.subr.mxu0 0.0
        %1442 = vmatpush2.msra.mxu0 0.0
        %1443 = vmatprep.subr.mxu0 0.0
        %1444 = vmatpush2.msra.mxu0 0.0
        %1445 = vmatprep.subr.mxu0 0.0
        %1446 = vmatpush2.msra.mxu0 0.0
        %1447 = vmatprep.subr.mxu0 0.0
        %1448 = vmatpush2.msra.mxu0 0.0
        %1449 = vmatprep.subr.mxu0 0.0
        %1450 = vmatpush2.msra.mxu0 0.0
        %1451 = vmatprep.mubr.f32.mxu0 0.0
        %1452 = vmatmul.mubr.f32.gmra.mxu0 %v1385
        %v1453 = vpop.f32.mrf.mxu0
        %v1454 = vadd.f32 0.0, %v1453
        %v1455 = vpop.f32.mrf.mxu0
        %1456 = vdwg.mxu0
        %v1458 = vsel %vm1035, %v1379, 0
        %1460 = vmatprep.subr.mxu0 0.0
        %1461 = vmatpush1.msra.mxu0 0.0
        %1462 = vmatprep.subr.mxu0 0.0
        %1463 = vmatpush1.msra.mxu0 0.0
        %1464 = vmatprep.subr.mxu0 0.0
        %1465 = vmatpush1.msra.mxu0 0.0
        %1466 = vmatprep.subr.mxu0 0.0
        %1467 = vmatpush1.msra.mxu0 0.0
        %1468 = vmatprep.subr.mxu0 0.0
        %1469 = vmatpush1.msra.mxu0 0.0
        %1470 = vmatprep.subr.mxu0 0.0
        %1471 = vmatpush1.msra.mxu0 0.0
        %1472 = vmatprep.subr.mxu0 0.0
        %1473 = vmatpush1.msra.mxu0 0.0
        %1474 = vmatprep.subr.mxu0 0.0
        %1475 = vmatpush1.msra.mxu0 0.0
        %1476 = vmatprep.subr.mxu0 0.0
        %1477 = vmatpush1.msra.mxu0 0.0
        %1478 = vmatprep.subr.mxu0 0.0
        %1479 = vmatpush1.msra.mxu0 0.0
        %1480 = vmatprep.subr.mxu0 0.0
        %1481 = vmatpush1.msra.mxu0 0.0
        %1482 = vmatprep.subr.mxu0 0.0
        %1483 = vmatpush1.msra.mxu0 0.0
        %1484 = vmatprep.subr.mxu0 0.0
        %1485 = vmatpush1.msra.mxu0 0.0
        %1486 = vmatprep.subr.mxu0 0.0
        %1487 = vmatpush1.msra.mxu0 0.0
        %1488 = vmatprep.subr.mxu0 0.0
        %1489 = vmatpush1.msra.mxu0 0.0
        %1490 = vmatprep.subr.mxu0 0.0
        %1491 = vmatpush1.msra.mxu0 %v926
        %1492 = vmatprep.subr.mxu0 0.0
        %1493 = vmatpush2.msra.mxu0 0.0
        %1494 = vmatprep.subr.mxu0 0.0
        %1495 = vmatpush2.msra.mxu0 0.0
        %1496 = vmatprep.subr.mxu0 0.0
        %1497 = vmatpush2.msra.mxu0 0.0
        %1498 = vmatprep.subr.mxu0 0.0
        %1499 = vmatpush2.msra.mxu0 0.0
        %1500 = vmatprep.subr.mxu0 0.0
        %1501 = vmatpush2.msra.mxu0 0.0
        %1502 = vmatprep.subr.mxu0 0.0
        %1503 = vmatpush2.msra.mxu0 0.0
        %1504 = vmatprep.subr.mxu0 0.0
        %1505 = vmatpush2.msra.mxu0 0.0
        %1506 = vmatprep.subr.mxu0 0.0
        %1507 = vmatpush2.msra.mxu0 0.0
        %1508 = vmatprep.subr.mxu0 0.0
        %1509 = vmatpush2.msra.mxu0 0.0
        %1510 = vmatprep.subr.mxu0 0.0
        %1511 = vmatpush2.msra.mxu0 0.0
        %1512 = vmatprep.subr.mxu0 0.0
        %1513 = vmatpush2.msra.mxu0 0.0
        %1514 = vmatprep.subr.mxu0 0.0
        %1515 = vmatpush2.msra.mxu0 0.0
        %1516 = vmatprep.subr.mxu0 0.0
        %1517 = vmatpush2.msra.mxu0 0.0
        %1518 = vmatprep.subr.mxu0 0.0
        %1519 = vmatpush2.msra.mxu0 0.0
        %1520 = vmatprep.subr.mxu0 0.0
        %1521 = vmatpush2.msra.mxu0 0.0
        %1522 = vmatprep.subr.mxu0 0.0
        %1523 = vmatpush2.msra.mxu0 0.0
        %1524 = vmatprep.mubr.f32.mxu0 0.0
        %1525 = vmatmul.mubr.f32.gmra.mxu0 %v1458
        %v1526 = vpop.f32.mrf.mxu0
        %v1527 = vadd.f32 0.0, %v1526
        %v1528 = vpop.f32.mrf.mxu0
        %1529 = vdwg.mxu0
        %v1531 = vsel %vm1035, %v1381, 0
        %1533 = vmatprep.subr.mxu0 0.0
        %1534 = vmatpush1.msra.mxu0 0.0
        %1535 = vmatprep.subr.mxu0 0.0
        %1536 = vmatpush1.msra.mxu0 0.0
        %1537 = vmatprep.subr.mxu0 0.0
        %1538 = vmatpush1.msra.mxu0 0.0
        %1539 = vmatprep.subr.mxu0 0.0
        %1540 = vmatpush1.msra.mxu0 0.0
        %1541 = vmatprep.subr.mxu0 0.0
        %1542 = vmatpush1.msra.mxu0 0.0
        %1543 = vmatprep.subr.mxu0 0.0
        %1544 = vmatpush1.msra.mxu0 0.0
        %1545 = vmatprep.subr.mxu0 0.0
        %1546 = vmatpush1.msra.mxu0 0.0
        %1547 = vmatprep.subr.mxu0 0.0
        %1548 = vmatpush1.msra.mxu0 0.0
        %1549 = vmatprep.subr.mxu0 0.0
        %1550 = vmatpush1.msra.mxu0 0.0
        %1551 = vmatprep.subr.mxu0 0.0
        %1552 = vmatpush1.msra.mxu0 0.0
        %1553 = vmatprep.subr.mxu0 0.0
        %1554 = vmatpush1.msra.mxu0 0.0
        %1555 = vmatprep.subr.mxu0 0.0
        %1556 = vmatpush1.msra.mxu0 0.0
        %1557 = vmatprep.subr.mxu0 0.0
        %1558 = vmatpush1.msra.mxu0 0.0
        %1559 = vmatprep.subr.mxu0 0.0
        %1560 = vmatpush1.msra.mxu0 0.0
        %1561 = vmatprep.subr.mxu0 0.0
        %1562 = vmatpush1.msra.mxu0 0.0
        %1563 = vmatprep.subr.mxu0 0.0
        %1564 = vmatpush1.msra.mxu0 %v978
        %1565 = vmatprep.subr.mxu0 0.0
        %1566 = vmatpush2.msra.mxu0 0.0
        %1567 = vmatprep.subr.mxu0 0.0
        %1568 = vmatpush2.msra.mxu0 0.0
        %1569 = vmatprep.subr.mxu0 0.0
        %1570 = vmatpush2.msra.mxu0 0.0
        %1571 = vmatprep.subr.mxu0 0.0
        %1572 = vmatpush2.msra.mxu0 0.0
        %1573 = vmatprep.subr.mxu0 0.0
        %1574 = vmatpush2.msra.mxu0 0.0
        %1575 = vmatprep.subr.mxu0 0.0
        %1576 = vmatpush2.msra.mxu0 0.0
        %1577 = vmatprep.subr.mxu0 0.0
        %1578 = vmatpush2.msra.mxu0 0.0
        %1579 = vmatprep.subr.mxu0 0.0
        %1580 = vmatpush2.msra.mxu0 0.0
        %1581 = vmatprep.subr.mxu0 0.0
        %1582 = vmatpush2.msra.mxu0 0.0
        %1583 = vmatprep.subr.mxu0 0.0
        %1584 = vmatpush2.msra.mxu0 0.0
        %1585 = vmatprep.subr.mxu0 0.0
        %1586 = vmatpush2.msra.mxu0 0.0
        %1587 = vmatprep.subr.mxu0 0.0
        %1588 = vmatpush2.msra.mxu0 0.0
        %1589 = vmatprep.subr.mxu0 0.0
        %1590 = vmatpush2.msra.mxu0 0.0
        %1591 = vmatprep.subr.mxu0 0.0
        %1592 = vmatpush2.msra.mxu0 0.0
        %1593 = vmatprep.subr.mxu0 0.0
        %1594 = vmatpush2.msra.mxu0 0.0
        %1595 = vmatprep.subr.mxu0 0.0
        %1596 = vmatpush2.msra.mxu0 0.0
        %1597 = vmatprep.mubr.f32.mxu0 0.0
        %1598 = vmatmul.mubr.f32.gmra.mxu0 %v1531
        %v1599 = vpop.f32.mrf.mxu0
        %v1600 = vadd.f32 0.0, %v1599
        %v1601 = vpop.f32.mrf.mxu0
        %1602 = vdwg.mxu0
        %v1604 = vsel %vm1035, %v1383, 0
        %1606 = vmatprep.subr.mxu0 0.0
        %1607 = vmatpush1.msra.mxu0 0.0
        %1608 = vmatprep.subr.mxu0 0.0
        %1609 = vmatpush1.msra.mxu0 0.0
        %1610 = vmatprep.subr.mxu0 0.0
        %1611 = vmatpush1.msra.mxu0 0.0
        %1612 = vmatprep.subr.mxu0 0.0
        %1613 = vmatpush1.msra.mxu0 0.0
        %1614 = vmatprep.subr.mxu0 0.0
        %1615 = vmatpush1.msra.mxu0 0.0
        %1616 = vmatprep.subr.mxu0 0.0
        %1617 = vmatpush1.msra.mxu0 0.0
        %1618 = vmatprep.subr.mxu0 0.0
        %1619 = vmatpush1.msra.mxu0 0.0
        %1620 = vmatprep.subr.mxu0 0.0
        %1621 = vmatpush1.msra.mxu0 0.0
        %1622 = vmatprep.subr.mxu0 0.0
        %1623 = vmatpush1.msra.mxu0 0.0
        %1624 = vmatprep.subr.mxu0 0.0
        %1625 = vmatpush1.msra.mxu0 0.0
        %1626 = vmatprep.subr.mxu0 0.0
        %1627 = vmatpush1.msra.mxu0 0.0
        %1628 = vmatprep.subr.mxu0 0.0
        %1629 = vmatpush1.msra.mxu0 0.0
        %1630 = vmatprep.subr.mxu0 0.0
        %1631 = vmatpush1.msra.mxu0 0.0
        %1632 = vmatprep.subr.mxu0 0.0
        %1633 = vmatpush1.msra.mxu0 0.0
        %1634 = vmatprep.subr.mxu0 0.0
        %1635 = vmatpush1.msra.mxu0 0.0
        %1636 = vmatprep.subr.mxu0 0.0
        %1637 = vmatpush1.msra.mxu0 %v1030
        %1638 = vmatprep.subr.mxu0 0.0
        %1639 = vmatpush2.msra.mxu0 0.0
        %1640 = vmatprep.subr.mxu0 0.0
        %1641 = vmatpush2.msra.mxu0 0.0
        %1642 = vmatprep.subr.mxu0 0.0
        %1643 = vmatpush2.msra.mxu0 0.0
        %1644 = vmatprep.subr.mxu0 0.0
        %1645 = vmatpush2.msra.mxu0 0.0
        %1646 = vmatprep.subr.mxu0 0.0
        %1647 = vmatpush2.msra.mxu0 0.0
        %1648 = vmatprep.subr.mxu0 0.0
        %1649 = vmatpush2.msra.mxu0 0.0
        %1650 = vmatprep.subr.mxu0 0.0
        %1651 = vmatpush2.msra.mxu0 0.0
        %1652 = vmatprep.subr.mxu0 0.0
        %1653 = vmatpush2.msra.mxu0 0.0
        %1654 = vmatprep.subr.mxu0 0.0
        %1655 = vmatpush2.msra.mxu0 0.0
        %1656 = vmatprep.subr.mxu0 0.0
        %1657 = vmatpush2.msra.mxu0 0.0
        %1658 = vmatprep.subr.mxu0 0.0
        %1659 = vmatpush2.msra.mxu0 0.0
        %1660 = vmatprep.subr.mxu0 0.0
        %1661 = vmatpush2.msra.mxu0 0.0
        %1662 = vmatprep.subr.mxu0 0.0
        %1663 = vmatpush2.msra.mxu0 0.0
        %1664 = vmatprep.subr.mxu0 0.0
        %1665 = vmatpush2.msra.mxu0 0.0
        %1666 = vmatprep.subr.mxu0 0.0
        %1667 = vmatpush2.msra.mxu0 0.0
        %1668 = vmatprep.subr.mxu0 0.0
        %1669 = vmatpush2.msra.mxu0 0.0
        %1670 = vmatprep.mubr.f32.mxu0 0.0
        %1671 = vmatmul.mubr.f32.gmra.mxu0 %v1604
        %v1672 = vpop.f32.mrf.mxu0
        %v1673 = vadd.f32 0.0, %v1672
        %v1674 = vpop.f32.mrf.mxu0
        %1675 = vdwg.mxu0
        %1676 = vst.msk [vmem:[%s241] sm:$0xff] %vm1035, %v1454
        %1678 = vrot.lane.b32.xlu0 %v1527, 8
        %v1679 = vpop.permute.xlu0 %1678
        %vm1681 = vcmask 130112
        %1682 = vst.msk [vmem:[%s241] sm:$0xff] %vm1681, %v1679
        %1684 = vrot.lane.b32.xlu0 %v1600, 16
        %v1685 = vpop.permute.xlu0 %1684
        %vm1687 = vcmask 195712
        %1688 = vst.msk [vmem:[%s241] sm:$0xff] %vm1687, %v1685
        %1690 = vrot.lane.b32.xlu0 %v1673, 24
        %v1691 = vpop.permute.xlu0 %1690
        %vm1693 = vcmask 261312
        %1694 = vst.msk [vmem:[%s241] sm:$0xff] %vm1693, %v1691
        %s1695 = sand.u32 %s147, 1
        %s1696 = scalar_lea.sflag [#allocation3], %s1695
        %s1697 = sand.u32 %s147, 1
        %s1698 = smul.addr %s1697, 8
        %s1699 = scalar_lea.vmem [#allocation2], %s1698
        // Predicated region
        $region41: #{tpu_custom_call.1} parent=39 // pred_check
          %p1700 = pneg %p157
        $region42: #{tpu_custom_call.1} parent=39 // pred_check_branch
          %1702 = sbr.rel (%p1700) target = $region44
        $region43: #{tpu_custom_call.1} parent=39 // pred_region
          %s1704 = ssub.s32 128, 128
          %1705 = vsyncadd %s1696, %s1704
          %s1706 = smul.addr %s19, 128
          %s1707 = scalar_lea.hbm %s5, %s1706
          %s1709 = sshll.u32 %s1699, 4
          %s1710 = int_to_ptr.vmem [resolvable:$true] %s1709
          %1712 = dma.vmem_to_hbm [thread:$0]  %s1710, 128, %s1707, %s1696
        $region44: #{tpu_custom_call.1} parent=39 // pred_fallthru
          _
      $region40: #{tpu_custom_call.1} parent=5 // pred_fallthru
        _
      %p1713 = scmp.le.s32.totalorder 2, %s14
      // Predicated region
      $region45: #{tpu_custom_call.1} parent=5 // pred_check
        %p1714 = pneg %p1713
      $region46: #{tpu_custom_call.1} parent=5 // pred_check_branch
        %1716 = sbr.rel (%p1714) target = $region48
      $region47: #{tpu_custom_call.1} parent=5 // pred_region
        %s1717 = ssub.s32 %s14, 2
        // Predicated region
        $region49: #{tpu_custom_call.1} parent=47 // pred_check
          %p1718 = pneg %p163
        $region50: #{tpu_custom_call.1} parent=47 // pred_check_branch
          %1720 = sbr.rel (%p1718) target = $region52
        $region51: #{tpu_custom_call.1} parent=47 // pred_region
          %s1721 = sand.u32 %s148, 1
          %s1722 = scalar_lea.sflag [#allocation3], %s1721
          %s1723 = sand.u32 %s148, 1
          %s1724 = smul.addr %s1723, 8
          %s1725 = scalar_lea.vmem [#allocation2], %s1724
          %1726 = dma.done %s1722, 128
        $region52: #{tpu_custom_call.1} parent=47 // pred_fallthru
          _
      $region48: #{tpu_custom_call.1} parent=5 // pred_fallthru
        _
    $region6: #{tpu_custom_call.1} parent=1 // loop_footer
      %s18 = sadd.s32 1, %s14
    $region7: #{tpu_custom_call.1} parent=1 // loop_footer_branch
      %13 = sbr.rel target = $region3
    $region8: #{tpu_custom_call.1} parent=1 // loop_exit
      _
    %1727 = vsyncpa [#allocation3], 1
    %s1728 = scalar_lea.sflag [#allocation3], 1
    %1729 = vsyncpa %s1728, 1

</llo_original>
